<compile_context>
chip_gen: v7x
topology: tpu7x:2x2x1
jax: 0.10.0
libtpu: 0.0.40
codegen_flags: <defaults>
</compile_context>

<pallas_src>
import functools

import jax
import jax.numpy as jnp
from jax import lax
from jax.experimental import pallas as pl
from jax.experimental.pallas import tpu as pltpu


# ------------------------------ fused kernel --------------------------------


def _bottleneck_fused_kernel(x_ref, w1_ref, b1_ref, w2_ref, b2_ref, w3_ref,
                             b3_ref, o_ref, *, H, W, planes, dilation,
                             rows_per_strip, compute_dtype):
    """conv1+bn1+relu -> conv2(3x3)+bn2+relu -> conv3+bn3+add+relu, one image.

    x_ref block: (1, H*W, Cin); o_ref block: (1, H*W, Cout).
    BN scales are pre-folded into the weights; b*_ref are folded biases (f32).
    """
    d = dilation
    HW = H * W
    cd = compute_dtype

    # ---- conv1 (1x1) + bn1 + relu : (H*W, Cin) @ (Cin, planes) ----
    x2d = x_ref[0]                                          # (HW, Cin) f32
    h1 = jnp.dot(x2d.astype(cd), w1_ref[...],
                 preferred_element_type=jnp.float32)        # (HW, planes) f32
    h1 = jnp.maximum(h1 + b1_ref[...], 0.0)

    # ---- stage the three kx-shifted copies of the conv1 output ----
    # staged[kx] has shape ((H + 2*d) * W, planes): d*W zero halo rows on top
    # and bottom (H padding) and the kx column shift realized as a sublane
    # roll of the flat array + an edge mask (no misaligned W-axis slices).
    h1_3d = h1.reshape(H, W, planes)
    col = lax.broadcasted_iota(jnp.int32, (W, 1), 0)        # W coordinate
    halo = jnp.zeros((d * W, planes), jnp.float32)
    staged = []
    for kx in range(3):
        s = (kx - 1) * d                  # column offset read by this tap
        if s == 0:
            vflat = h1
        else:
            # Zero the input columns never validly read by this tap so the
            # flat roll's row-crossing / wrap-around entries become zeros.
            if s < 0:
                v = jnp.where(col < W + s, h1_3d, 0.0)
            else:
                v = jnp.where(col >= s, h1_3d, 0.0)
            vflat = pltpu.roll(v.reshape(HW, planes), shift=(-s) % HW, axis=0)
        staged.append(jnp.concatenate([halo, vflat, halo], axis=0).astype(cd))

    # ---- conv2 (3x3, dilation d)+bn2+relu, conv3 (1x1)+bn3+residual+relu ----
    # Processed in H-row strips to bound the live f32 accumulators.
    for r0 in range(0, H, rows_per_strip):
        th = min(rows_per_strip, H - r0)
        tw = th * W
        o0 = r0 * W

        acc2 = jnp.zeros((tw, planes), jnp.float32)
        for ky in range(3):
            base = (r0 + ky * d) * W      # aligned sublane offset when W%8==0
            for kx in range(3):
                patch = staged[kx][base:base + tw, :]
                acc2 = acc2 + jnp.dot(patch, w2_ref[ky, kx],
                                      preferred_element_type=jnp.float32)
        h2 = jnp.maximum(acc2 + b2_ref[...], 0.0).astype(cd)

        acc3 = jnp.dot(h2, w3_ref[...], preferred_element_type=jnp.float32)
        res = x2d[o0:o0 + tw, :].astype(jnp.float32)        # identity shortcut
        out = jnp.maximum(acc3 + b3_ref[...] + res, 0.0)
        o_ref[0, pl.ds(o0, tw), :] = out.astype(o_ref.dtype)


# ------------------------------ wrapper --------------------------------------


def fold_bn(gamma, beta, mean, var, eps=1e-5):
    scale = gamma / jnp.sqrt(var + eps)
    bias = beta - mean * scale
    return scale.reshape(1, -1), bias.reshape(1, -1)


def bottleneck_forward(x_nchw, p, *, dilation=1, compute_dtype=jnp.bfloat16,
                       rows_per_strip=None):
    """Bottleneck forward (stride=1, identity shortcut). NCHW in / NCHW out."""
    # TODO(synk): stride>1 and the downsample shortcut path are not implemented.
    x = jnp.transpose(x_nchw, (0, 2, 3, 1))                 # NCHW -> NHWC
    N, H, W, Cin = x.shape
    planes = p["w1"].shape[1]
    Cout = p["w3"].shape[1]
    if Cout != Cin:
        raise NotImplementedError("identity shortcut needs planes*4 == inplanes")

    s1, b1 = fold_bn(*p["bn1"])
    s2, b2 = fold_bn(*p["bn2"])
    s3, b3 = fold_bn(*p["bn3"])

    # Fold BN scale into the conv weights (exact for eval-mode BN) and cast the
    # matmul operands to the compute dtype (bf16 MXU path); biases stay f32.
    w1c = (p["w1"] * s1).astype(compute_dtype)                        # (Cin, planes)
    w2c = (p["w2"] * s2.reshape(1, 1, 1, -1)).astype(compute_dtype)   # (3,3,pl,pl)
    w3c = (p["w3"] * s3).astype(compute_dtype)                        # (planes, Cout)

    if rows_per_strip is None:
        rows_per_strip = max(1, min(H, 1024 // max(W, 1)))

    HW = H * W
    x3 = x.reshape(N, HW, Cin)

    kernel = functools.partial(
        _bottleneck_fused_kernel, H=H, W=W, planes=planes, dilation=dilation,
        rows_per_strip=rows_per_strip, compute_dtype=compute_dtype)

    flops = 2 * N * HW * (Cin * planes + 9 * planes * planes + planes * Cout)
    bytes_accessed = int(
        sum(a.size * a.dtype.itemsize for a in (x3, w1c, b1, w2c, b2, w3c, b3))
        + N * HW * Cout * x.dtype.itemsize)

    out = pl.pallas_call(
        kernel,
        out_shape=jax.ShapeDtypeStruct((N, HW, Cout), x.dtype),
        grid=(N,),
        in_specs=[
            pl.BlockSpec((1, HW, Cin), lambda n: (n, 0, 0)),
            pl.BlockSpec((Cin, planes), lambda n: (0, 0)),
            pl.BlockSpec((1, planes), lambda n: (0, 0)),
            pl.BlockSpec((3, 3, planes, planes), lambda n: (0, 0, 0, 0)),
            pl.BlockSpec((1, planes), lambda n: (0, 0)),
            pl.BlockSpec((planes, Cout), lambda n: (0, 0)),
            pl.BlockSpec((1, Cout), lambda n: (0, 0)),
        ],
        out_specs=pl.BlockSpec((1, HW, Cout), lambda n: (n, 0, 0)),
        compiler_params=pltpu.CompilerParams(
            dimension_semantics=("parallel",),
            vmem_limit_bytes=32 * 1024 * 1024),
        cost_estimate=pl.CostEstimate(flops=flops, transcendentals=0,
                                      bytes_accessed=bytes_accessed),
    )(x3, w1c, b1, w2c, b2, w3c, b3)

    return jnp.transpose(out.reshape(N, H, W, Cout), (0, 3, 1, 2))


# ------------------------------ reference ------------------------------------


def bottleneck_reference_nchw(x, p, *, dilation=1):
    def conv(x, w, padding=0, dilation=1):
        return lax.conv_general_dilated(
            x, w, window_strides=(1, 1),
            padding=[(padding, padding)] * 2,
            rhs_dilation=(dilation, dilation),
            dimension_numbers=("NCHW", "OIHW", "NCHW"))

    def bn(x, stats, eps=1e-5):
        gamma, beta, mean, var = stats
        g = (gamma / jnp.sqrt(var + eps)).reshape(1, -1, 1, 1)
        b = (beta - mean * gamma / jnp.sqrt(var + eps)).reshape(1, -1, 1, 1)
        return x * g + b

    out = jax.nn.relu(bn(conv(x, p["w1_oihw"]), p["bn1"]))
    out = jax.nn.relu(bn(conv(out, p["w2_oihw"], padding=dilation,
                              dilation=dilation), p["bn2"]))
    out = bn(conv(out, p["w3_oihw"]), p["bn3"])
    return jax.nn.relu(out + x)


# --------------------------------- main ---------------------------------------


if __name__ == "__main__":
    key = jax.random.PRNGKey(0)
    ks = jax.random.split(key, 16)

    N, inplanes, H, W = 2, 16, 8, 8
    planes = 4                        # expansion 4 -> planes * 4 == inplanes
    outplanes = planes * 4

    # PyTorch-style OIHW conv weights (bias=False), deterministic.
    w1_oihw = 0.1 * jax.random.normal(ks[0], (planes, inplanes, 1, 1), jnp.float32)
    w2_oihw = 0.1 * jax.random.normal(ks[1], (planes, planes, 3, 3), jnp.float32)
    w3_oihw = 0.1 * jax.random.normal(ks[2], (outplanes, planes, 1, 1), jnp.float32)

    def bn_params(k, c):
        k1, k2, k3, k4 = jax.random.split(k, 4)
        gamma = 1.0 + 0.1 * jax.random.normal(k1, (c,), jnp.float32)
        beta = 0.1 * jax.random.normal(k2, (c,), jnp.float32)
        mean = 0.1 * jax.random.normal(k3, (c,), jnp.float32)
        var = 1.0 + 0.1 * jnp.abs(jax.random.normal(k4, (c,), jnp.float32))
        return (gamma, beta, mean, var)

    params = {
        # kernel-side layouts: 1x1 weights (Cin, Cout), 3x3 weight HWIO.
        "w1": jnp.transpose(w1_oihw[:, :, 0, 0], (1, 0)),
        "w2": jnp.transpose(w2_oihw, (2, 3, 1, 0)),
        "w3": jnp.transpose(w3_oihw[:, :, 0, 0], (1, 0)),
        "w1_oihw": w1_oihw, "w2_oihw": w2_oihw, "w3_oihw": w3_oihw,
        "bn1": bn_params(ks[3], planes),
        "bn2": bn_params(ks[4], planes),
        "bn3": bn_params(ks[5], outplanes),
    }

    x = jax.random.normal(ks[6], (N, inplanes, H, W), jnp.float32)

    # f32 compute path (tight check, incl. dilation=2) + bf16 MXU path.
    checks = ((1, jnp.float32, 1e-3), (2, jnp.float32, 1e-3),
              (1, jnp.bfloat16, 5e-2))
    for dil, cdt, tol in checks:
        out = jax.block_until_ready(
            bottleneck_forward(x, params, dilation=dil, compute_dtype=cdt))
        ref = jax.block_until_ready(
            bottleneck_reference_nchw(x, params, dilation=dil))
        assert out.shape == (N, inplanes, H, W), out.shape
        err = float(jnp.max(jnp.abs(out - ref)))
        assert jnp.allclose(out, ref, atol=tol, rtol=tol), (dil, str(cdt), err)

    print("KERNEL_OK")
</pallas_src>

<mosaic_0001>
module attributes {stable_mosaic.version = 11 : i64} {
  func.func @_bottleneck_fused_kernel(%arg0: i32, %arg1: memref<1x64x16xf32, #tpu.memory_space<vmem>>, %arg2: memref<16x4xf32, #tpu.memory_space<vmem>>, %arg3: memref<1x4xf32, #tpu.memory_space<vmem>>, %arg4: memref<3x3x4x4xf32, #tpu.memory_space<vmem>>, %arg5: memref<1x4xf32, #tpu.memory_space<vmem>>, %arg6: memref<4x16xf32, #tpu.memory_space<vmem>>, %arg7: memref<1x16xf32, #tpu.memory_space<vmem>>, %arg8: memref<1x64x16xf32, #tpu.memory_space<vmem>>) attributes {dimension_semantics = [#tpu.dimension_semantics<parallel>], iteration_bounds = array<i64: 2>, scalar_prefetch = 0 : i64, scratch_operands = 0 : i64, tpu.core_type = #tpu.core_type<tc>, window_params = [{transform_indices = @transform_0, window_bounds = array<i64: 1, 64, 16>}, {pipeline_mode = #tpu.pipeline_mode<synchronous>, transform_indices = @transform_1, window_bounds = array<i64: 16, 4>}, {pipeline_mode = #tpu.pipeline_mode<synchronous>, transform_indices = @transform_2, window_bounds = array<i64: 1, 4>}, {pipeline_mode = #tpu.pipeline_mode<synchronous>, transform_indices = @transform_3, window_bounds = array<i64: 3, 3, 4, 4>}, {pipeline_mode = #tpu.pipeline_mode<synchronous>, transform_indices = @transform_4, window_bounds = array<i64: 1, 4>}, {pipeline_mode = #tpu.pipeline_mode<synchronous>, transform_indices = @transform_5, window_bounds = array<i64: 4, 16>}, {pipeline_mode = #tpu.pipeline_mode<synchronous>, transform_indices = @transform_6, window_bounds = array<i64: 1, 16>}, {transform_indices = @transform_7, window_bounds = array<i64: 1, 64, 16>}]} {
    %c0 = arith.constant 0 : index
    %c0_0 = arith.constant 0 : index
    %c0_1 = arith.constant 0 : index
    %0 = vector.load %arg1[%c0, %c0_0, %c0_1] : memref<1x64x16xf32, #tpu.memory_space<vmem>>, vector<1x64x16xf32>
    %1 = vector.shape_cast %0 : vector<1x64x16xf32> to vector<64x16xf32>
    %c0_2 = arith.constant 0 : index
    %c0_3 = arith.constant 0 : index
    %2 = vector.load %arg2[%c0_2, %c0_3] : memref<16x4xf32, #tpu.memory_space<vmem>>, vector<16x4xf32>
    %cst = arith.constant dense<0.000000e+00> : vector<64x4xf32>
    %3 = tpu.matmul %1, %2, %cst {dimension_numbers = #tpu.dot_dimension_numbers<[1], [0], [0], [1], [0, 0, 1, 1], [], []>} : vector<64x16xf32>, vector<16x4xf32>, vector<64x4xf32> -> vector<64x4xf32>
    %c0_4 = arith.constant 0 : index
    %c0_5 = arith.constant 0 : index
    %4 = vector.load %arg3[%c0_4, %c0_5] : memref<1x4xf32, #tpu.memory_space<vmem>>, vector<1x4xf32>
    %5 = vector.broadcast %4 : vector<1x4xf32> to vector<64x4xf32>
    %6 = arith.addf %3, %5 : vector<64x4xf32>
    %cst_6 = arith.constant 0.000000e+00 : f32
    %7 = vector.broadcast %cst_6 : f32 to vector<64x4xf32>
    %8 = arith.maximumf %6, %7 : vector<64x4xf32>
    %9 = vector.shape_cast %8 : vector<64x4xf32> to vector<8x8x4xf32>
    %10 = tpu.iota {dimensions = array<i32: 0>} : vector<8x1xi32>
    %cst_7 = arith.constant 0.000000e+00 : f32
    %11 = vector.broadcast %cst_7 : f32 to vector<8x4xf32>
    %c7_i32 = arith.constant 7 : i32
    %12 = vector.broadcast %c7_i32 : i32 to vector<8x1xi32>
    %13 = arith.cmpi slt, %10, %12 : vector<8x1xi32>
    %cst_8 = arith.constant 0.000000e+00 : f32
    %14 = vector.shape_cast %13 : vector<8x1xi1> to vector<1x8x1xi1>
    %15 = vector.broadcast %14 : vector<1x8x1xi1> to vector<8x8x4xi1>
    %16 = vector.broadcast %cst_8 : f32 to vector<8x8x4xf32>
    %17 = arith.select %15, %9, %16 : vector<8x8x4xi1>, vector<8x8x4xf32>
    %18 = vector.shape_cast %17 : vector<8x8x4xf32> to vector<64x4xf32>
    %c1_i32 = arith.constant 1 : i32
    %19 = tpu.dynamic_rotate %18 by %c1_i32 dim 0 : vector<64x4xf32>, i32 -> vector<64x4xf32>
    %20 = tpu.concatenate %11, %19, %11 in 0 : vector<8x4xf32>, vector<64x4xf32>, vector<8x4xf32> -> vector<80x4xf32>
    %21 = tpu.concatenate %11, %8, %11 in 0 : vector<8x4xf32>, vector<64x4xf32>, vector<8x4xf32> -> vector<80x4xf32>
    %c1_i32_9 = arith.constant 1 : i32
    %22 = vector.broadcast %c1_i32_9 : i32 to vector<8x1xi32>
    %23 = arith.cmpi sge, %10, %22 : vector<8x1xi32>
    %cst_10 = arith.constant 0.000000e+00 : f32
    %24 = vector.shape_cast %23 : vector<8x1xi1> to vector<1x8x1xi1>
    %25 = vector.broadcast %24 : vector<1x8x1xi1> to vector<8x8x4xi1>
    %26 = vector.broadcast %cst_10 : f32 to vector<8x8x4xf32>
    %27 = arith.select %25, %9, %26 : vector<8x8x4xi1>, vector<8x8x4xf32>
    %28 = vector.shape_cast %27 : vector<8x8x4xf32> to vector<64x4xf32>
    %c63_i32 = arith.constant 63 : i32
    %29 = tpu.dynamic_rotate %28 by %c63_i32 dim 0 : vector<64x4xf32>, i32 -> vector<64x4xf32>
    %30 = tpu.concatenate %11, %29, %11 in 0 : vector<8x4xf32>, vector<64x4xf32>, vector<8x4xf32> -> vector<80x4xf32>
    %cst_11 = arith.constant 0.000000e+00 : f32
    %31 = vector.broadcast %cst_11 : f32 to vector<64x4xf32>
    %32 = vector.extract_strided_slice %20 {offsets = [0, 0], sizes = [64, 4], strides = [1, 1]} : vector<80x4xf32> to vector<64x4xf32>
    %c0_12 = arith.constant 0 : index
    %c0_13 = arith.constant 0 : index
    %c0_14 = arith.constant 0 : index
    %c0_15 = arith.constant 0 : index
    %33 = vector.load %arg4[%c0_12, %c0_13, %c0_14, %c0_15] : memref<3x3x4x4xf32, #tpu.memory_space<vmem>>, vector<1x1x4x4xf32>
    %34 = vector.shape_cast %33 : vector<1x1x4x4xf32> to vector<4x4xf32>
    %cst_16 = arith.constant dense<0.000000e+00> : vector<64x4xf32>
    %35 = tpu.matmul %32, %34, %cst_16 {dimension_numbers = #tpu.dot_dimension_numbers<[1], [0], [0], [1], [0, 0, 1, 1], [], []>} : vector<64x4xf32>, vector<4x4xf32>, vector<64x4xf32> -> vector<64x4xf32>
    %36 = arith.addf %31, %35 : vector<64x4xf32>
    %37 = vector.extract_strided_slice %21 {offsets = [0, 0], sizes = [64, 4], strides = [1, 1]} : vector<80x4xf32> to vector<64x4xf32>
    %c0_17 = arith.constant 0 : index
    %c1 = arith.constant 1 : index
    %c0_18 = arith.constant 0 : index
    %c0_19 = arith.constant 0 : index
    %38 = vector.load %arg4[%c0_17, %c1, %c0_18, %c0_19] : memref<3x3x4x4xf32, #tpu.memory_space<vmem>>, vector<1x1x4x4xf32>
    %39 = vector.shape_cast %38 : vector<1x1x4x4xf32> to vector<4x4xf32>
    %cst_20 = arith.constant dense<0.000000e+00> : vector<64x4xf32>
    %40 = tpu.matmul %37, %39, %cst_20 {dimension_numbers = #tpu.dot_dimension_numbers<[1], [0], [0], [1], [0, 0, 1, 1], [], []>} : vector<64x4xf32>, vector<4x4xf32>, vector<64x4xf32> -> vector<64x4xf32>
    %41 = arith.addf %36, %40 : vector<64x4xf32>
    %42 = vector.extract_strided_slice %30 {offsets = [0, 0], sizes = [64, 4], strides = [1, 1]} : vector<80x4xf32> to vector<64x4xf32>
    %c0_21 = arith.constant 0 : index
    %c2 = arith.constant 2 : index
    %c0_22 = arith.constant 0 : index
    %c0_23 = arith.constant 0 : index
    %43 = vector.load %arg4[%c0_21, %c2, %c0_22, %c0_23] : memref<3x3x4x4xf32, #tpu.memory_space<vmem>>, vector<1x1x4x4xf32>
    %44 = vector.shape_cast %43 : vector<1x1x4x4xf32> to vector<4x4xf32>
    %cst_24 = arith.constant dense<0.000000e+00> : vector<64x4xf32>
    %45 = tpu.matmul %42, %44, %cst_24 {dimension_numbers = #tpu.dot_dimension_numbers<[1], [0], [0], [1], [0, 0, 1, 1], [], []>} : vector<64x4xf32>, vector<4x4xf32>, vector<64x4xf32> -> vector<64x4xf32>
    %46 = arith.addf %41, %45 : vector<64x4xf32>
    %47 = vector.extract_strided_slice %20 {offsets = [8, 0], sizes = [64, 4], strides = [1, 1]} : vector<80x4xf32> to vector<64x4xf32>
    %c1_25 = arith.constant 1 : index
    %c0_26 = arith.constant 0 : index
    %c0_27 = arith.constant 0 : index
    %c0_28 = arith.constant 0 : index
    %48 = vector.load %arg4[%c1_25, %c0_26, %c0_27, %c0_28] : memref<3x3x4x4xf32, #tpu.memory_space<vmem>>, vector<1x1x4x4xf32>
    %49 = vector.shape_cast %48 : vector<1x1x4x4xf32> to vector<4x4xf32>
    %cst_29 = arith.constant dense<0.000000e+00> : vector<64x4xf32>
    %50 = tpu.matmul %47, %49, %cst_29 {dimension_numbers = #tpu.dot_dimension_numbers<[1], [0], [0], [1], [0, 0, 1, 1], [], []>} : vector<64x4xf32>, vector<4x4xf32>, vector<64x4xf32> -> vector<64x4xf32>
    %51 = arith.addf %46, %50 : vector<64x4xf32>
    %52 = vector.extract_strided_slice %21 {offsets = [8, 0], sizes = [64, 4], strides = [1, 1]} : vector<80x4xf32> to vector<64x4xf32>
    %c1_30 = arith.constant 1 : index
    %c1_31 = arith.constant 1 : index
    %c0_32 = arith.constant 0 : index
    %c0_33 = arith.constant 0 : index
    %53 = vector.load %arg4[%c1_30, %c1_31, %c0_32, %c0_33] : memref<3x3x4x4xf32, #tpu.memory_space<vmem>>, vector<1x1x4x4xf32>
    %54 = vector.shape_cast %53 : vector<1x1x4x4xf32> to vector<4x4xf32>
    %cst_34 = arith.constant dense<0.000000e+00> : vector<64x4xf32>
    %55 = tpu.matmul %52, %54, %cst_34 {dimension_numbers = #tpu.dot_dimension_numbers<[1], [0], [0], [1], [0, 0, 1, 1], [], []>} : vector<64x4xf32>, vector<4x4xf32>, vector<64x4xf32> -> vector<64x4xf32>
    %56 = arith.addf %51, %55 : vector<64x4xf32>
    %57 = vector.extract_strided_slice %30 {offsets = [8, 0], sizes = [64, 4], strides = [1, 1]} : vector<80x4xf32> to vector<64x4xf32>
    %c1_35 = arith.constant 1 : index
    %c2_36 = arith.constant 2 : index
    %c0_37 = arith.constant 0 : index
    %c0_38 = arith.constant 0 : index
    %58 = vector.load %arg4[%c1_35, %c2_36, %c0_37, %c0_38] : memref<3x3x4x4xf32, #tpu.memory_space<vmem>>, vector<1x1x4x4xf32>
    %59 = vector.shape_cast %58 : vector<1x1x4x4xf32> to vector<4x4xf32>
    %cst_39 = arith.constant dense<0.000000e+00> : vector<64x4xf32>
    %60 = tpu.matmul %57, %59, %cst_39 {dimension_numbers = #tpu.dot_dimension_numbers<[1], [0], [0], [1], [0, 0, 1, 1], [], []>} : vector<64x4xf32>, vector<4x4xf32>, vector<64x4xf32> -> vector<64x4xf32>
    %61 = arith.addf %56, %60 : vector<64x4xf32>
    %62 = vector.extract_strided_slice %20 {offsets = [16, 0], sizes = [64, 4], strides = [1, 1]} : vector<80x4xf32> to vector<64x4xf32>
    %c2_40 = arith.constant 2 : index
    %c0_41 = arith.constant 0 : index
    %c0_42 = arith.constant 0 : index
    %c0_43 = arith.constant 0 : index
    %63 = vector.load %arg4[%c2_40, %c0_41, %c0_42, %c0_43] : memref<3x3x4x4xf32, #tpu.memory_space<vmem>>, vector<1x1x4x4xf32>
    %64 = vector.shape_cast %63 : vector<1x1x4x4xf32> to vector<4x4xf32>
    %cst_44 = arith.constant dense<0.000000e+00> : vector<64x4xf32>
    %65 = tpu.matmul %62, %64, %cst_44 {dimension_numbers = #tpu.dot_dimension_numbers<[1], [0], [0], [1], [0, 0, 1, 1], [], []>} : vector<64x4xf32>, vector<4x4xf32>, vector<64x4xf32> -> vector<64x4xf32>
    %66 = arith.addf %61, %65 : vector<64x4xf32>
    %67 = vector.extract_strided_slice %21 {offsets = [16, 0], sizes = [64, 4], strides = [1, 1]} : vector<80x4xf32> to vector<64x4xf32>
    %c2_45 = arith.constant 2 : index
    %c1_46 = arith.constant 1 : index
    %c0_47 = arith.constant 0 : index
    %c0_48 = arith.constant 0 : index
    %68 = vector.load %arg4[%c2_45, %c1_46, %c0_47, %c0_48] : memref<3x3x4x4xf32, #tpu.memory_space<vmem>>, vector<1x1x4x4xf32>
    %69 = vector.shape_cast %68 : vector<1x1x4x4xf32> to vector<4x4xf32>
    %cst_49 = arith.constant dense<0.000000e+00> : vector<64x4xf32>
    %70 = tpu.matmul %67, %69, %cst_49 {dimension_numbers = #tpu.dot_dimension_numbers<[1], [0], [0], [1], [0, 0, 1, 1], [], []>} : vector<64x4xf32>, vector<4x4xf32>, vector<64x4xf32> -> vector<64x4xf32>
    %71 = arith.addf %66, %70 : vector<64x4xf32>
    %72 = vector.extract_strided_slice %30 {offsets = [16, 0], sizes = [64, 4], strides = [1, 1]} : vector<80x4xf32> to vector<64x4xf32>
    %c2_50 = arith.constant 2 : index
    %c2_51 = arith.constant 2 : index
    %c0_52 = arith.constant 0 : index
    %c0_53 = arith.constant 0 : index
    %73 = vector.load %arg4[%c2_50, %c2_51, %c0_52, %c0_53] : memref<3x3x4x4xf32, #tpu.memory_space<vmem>>, vector<1x1x4x4xf32>
    %74 = vector.shape_cast %73 : vector<1x1x4x4xf32> to vector<4x4xf32>
    %cst_54 = arith.constant dense<0.000000e+00> : vector<64x4xf32>
    %75 = tpu.matmul %72, %74, %cst_54 {dimension_numbers = #tpu.dot_dimension_numbers<[1], [0], [0], [1], [0, 0, 1, 1], [], []>} : vector<64x4xf32>, vector<4x4xf32>, vector<64x4xf32> -> vector<64x4xf32>
    %76 = arith.addf %71, %75 : vector<64x4xf32>
    %c0_55 = arith.constant 0 : index
    %c0_56 = arith.constant 0 : index
    %77 = vector.load %arg5[%c0_55, %c0_56] : memref<1x4xf32, #tpu.memory_space<vmem>>, vector<1x4xf32>
    %78 = vector.broadcast %77 : vector<1x4xf32> to vector<64x4xf32>
    %79 = arith.addf %76, %78 : vector<64x4xf32>
    %cst_57 = arith.constant 0.000000e+00 : f32
    %80 = vector.broadcast %cst_57 : f32 to vector<64x4xf32>
    %81 = arith.maximumf %79, %80 : vector<64x4xf32>
    %c0_58 = arith.constant 0 : index
    %c0_59 = arith.constant 0 : index
    %82 = vector.load %arg6[%c0_58, %c0_59] : memref<4x16xf32, #tpu.memory_space<vmem>>, vector<4x16xf32>
    %cst_60 = arith.constant dense<0.000000e+00> : vector<64x16xf32>
    %83 = tpu.matmul %81, %82, %cst_60 {dimension_numbers = #tpu.dot_dimension_numbers<[1], [0], [0], [1], [0, 0, 1, 1], [], []>} : vector<64x4xf32>, vector<4x16xf32>, vector<64x16xf32> -> vector<64x16xf32>
    %c0_61 = arith.constant 0 : index
    %c0_62 = arith.constant 0 : index
    %84 = vector.load %arg7[%c0_61, %c0_62] : memref<1x16xf32, #tpu.memory_space<vmem>>, vector<1x16xf32>
    %85 = vector.broadcast %84 : vector<1x16xf32> to vector<64x16xf32>
    %86 = arith.addf %83, %85 : vector<64x16xf32>
    %87 = arith.addf %86, %1 : vector<64x16xf32>
    %cst_63 = arith.constant 0.000000e+00 : f32
    %88 = vector.broadcast %cst_63 : f32 to vector<64x16xf32>
    %89 = arith.maximumf %87, %88 : vector<64x16xf32>
    %c0_64 = arith.constant 0 : index
    %c0_65 = arith.constant 0 : index
    %c0_66 = arith.constant 0 : index
    %90 = vector.load %arg8[%c0_64, %c0_65, %c0_66] : memref<1x64x16xf32, #tpu.memory_space<vmem>>, vector<1x64x16xf32>
    %91 = vector.shape_cast %90 : vector<1x64x16xf32> to vector<64x16xf32>
    %92 = vector.shape_cast %89 : vector<64x16xf32> to vector<1x64x16xf32>
    tpu.vector_store %arg8[%c0_64, %c0_65, %c0_66], %92 {strides = array<i32>} : memref<1x64x16xf32, #tpu.memory_space<vmem>>, vector<1x64x16xf32>,
    return
  }
  func.func @transform_0(%arg0: i32) -> (i32, i32, i32) {
    %c0_i32 = arith.constant 0 : i32
    %c0_i32_0 = arith.constant 0 : i32
    %c0_i32_1 = arith.constant 0 : i32
    return %arg0, %c0_i32, %c0_i32_0 : i32, i32, i32
  }
  func.func @transform_1(%arg0: i32) -> (i32, i32) {
    %c0_i32 = arith.constant 0 : i32
    %c0_i32_0 = arith.constant 0 : i32
    %c0_i32_1 = arith.constant 0 : i32
    return %c0_i32, %c0_i32_0 : i32, i32
  }
  func.func @transform_2(%arg0: i32) -> (i32, i32) {
    %c0_i32 = arith.constant 0 : i32
    %c0_i32_0 = arith.constant 0 : i32
    %c0_i32_1 = arith.constant 0 : i32
    return %c0_i32, %c0_i32_0 : i32, i32
  }
  func.func @transform_3(%arg0: i32) -> (i32, i32, i32, i32) {
    %c0_i32 = arith.constant 0 : i32
    %c0_i32_0 = arith.constant 0 : i32
    %c0_i32_1 = arith.constant 0 : i32
    %c0_i32_2 = arith.constant 0 : i32
    %c0_i32_3 = arith.constant 0 : i32
    return %c0_i32, %c0_i32_0, %c0_i32_1, %c0_i32_2 : i32, i32, i32, i32
  }
  func.func @transform_4(%arg0: i32) -> (i32, i32) {
    %c0_i32 = arith.constant 0 : i32
    %c0_i32_0 = arith.constant 0 : i32
    %c0_i32_1 = arith.constant 0 : i32
    return %c0_i32, %c0_i32_0 : i32, i32
  }
  func.func @transform_5(%arg0: i32) -> (i32, i32) {
    %c0_i32 = arith.constant 0 : i32
    %c0_i32_0 = arith.constant 0 : i32
    %c0_i32_1 = arith.constant 0 : i32
    return %c0_i32, %c0_i32_0 : i32, i32
  }
  func.func @transform_6(%arg0: i32) -> (i32, i32) {
    %c0_i32 = arith.constant 0 : i32
    %c0_i32_0 = arith.constant 0 : i32
    %c0_i32_1 = arith.constant 0 : i32
    return %c0_i32, %c0_i32_0 : i32, i32
  }
  func.func @transform_7(%arg0: i32) -> (i32, i32, i32) {
    %c0_i32 = arith.constant 0 : i32
    %c0_i32_0 = arith.constant 0 : i32
    %c0_i32_1 = arith.constant 0 : i32
    return %arg0, %c0_i32, %c0_i32_0 : i32, i32, i32
  }
}

</mosaic_0001>

<llo_original>
// kernel: tpu_custom_call.1
$region0: #{tpu_custom_call.1}
  #allocation0 [shape = 'u32[]', space=smem, size = 0x4, offset = 0x4, fixed_abs, tag = 'smem constant byte address 0x4 - core index']
  #allocation1 [shape = 'u32[144,128]{1,0:T(1,128)}', space=vmem, size = 0x12000, scoped, tag = 'internal scratch']
  %s0 = inlined_call_operand.vmem [shape: f32[2,64,16], index: 0, kind: input, shape index: {}]
  %s1 = inlined_call_operand.vmem [shape: f32[16,4], index: 1, kind: input, shape index: {}]
  %s2 = inlined_call_operand.vmem [shape: f32[1,4], index: 2, kind: input, shape index: {}]
  %s3 = inlined_call_operand.vmem [shape: f32[3,3,4,4], index: 3, kind: input, shape index: {}]
  %s4 = inlined_call_operand.vmem [shape: f32[1,4], index: 4, kind: input, shape index: {}]
  %s5 = inlined_call_operand.vmem [shape: f32[4,16], index: 5, kind: input, shape index: {}]
  %s6 = inlined_call_operand.vmem [shape: f32[1,16], index: 6, kind: input, shape index: {}]
  %s7 = inlined_call_operand.vmem [shape: f32[2,64,16], index: 7, kind: output, shape index: {}]
  %s8 = sld [smem:[#allocation0]]
  $region61: #{tpu_custom_call.1} parent=0
    _
  %s10 = ssub.s32 1, %s8
  %s11 = scalar_select 0, %s10, %s8
  loop: start=0, step=1, limit=4
  $region2: #{tpu_custom_call.1} parent=0 // loop_pre_header
    _
  $region3: #{tpu_custom_call.1} parent=0 // loop_header
    %s13 = sphi 0, %s17
    %p14 = scmp.ge.s32.totalorder %s13, 4
    %s23 = sphi 0, %s25
    %s26 = sphi 0, %s23
    %s27 = sphi 0, %s26
    %s43 = sphi 0, %s27
    %s47 = sphi 0, %s47
    %s49 = sphi 0, %s47
    %s50 = sphi 0, %s49
    %s64 = sphi 0, %s50
    %s68 = sphi 0, %s68
    %s70 = sphi 0, %s68
    %s71 = sphi 0, %s70
    %s85 = sphi 0, %s71
    %s89 = sphi 0, %s89
    %s91 = sphi 0, %s89
    %s92 = sphi 0, %s91
    %s106 = sphi 0, %s92
    %s110 = sphi 0, %s110
    %s112 = sphi 0, %s110
    %s113 = sphi 0, %s112
    %s127 = sphi 0, %s113
    %s131 = sphi 0, %s131
    %s133 = sphi 0, %s131
    %s134 = sphi 0, %s133
    %s148 = sphi 0, %s134
    %s152 = sphi 0, %s152
    %s154 = sphi 0, %s152
    %s155 = sphi 0, %s154
    %s169 = sphi 0, %s155
    %s175 = sphi 0, %s177
    %s178 = sphi 0, %s175
    %s179 = sphi 0, %s178
    %s195 = sphi 0, %s179
  $region4: #{tpu_custom_call.1} parent=0 // loop_header_branch
    %16 = sbr.rel (%p14) target = $region8
  $region5: #{tpu_custom_call.1} parent=0 // loop_body
    %s18 = ssub.s32 %s13, 1
    %s19 = ssub.s32 %s13, 2
    %s20 = sadd.s32 %s13, 1
    %s21 = ssub.s32 %s13, %s20
    %p22 = scmp.eq.s32.totalorder %s21, 0
    %s24 = sadd.s32 %s23, 1
    %s25 = scalar_select %p22, %s23, %s24
    %p28 = pneg %p22
    %p29 = scmp.eq.s32.totalorder %s13, 1
    %p30 = por %p28, %p29
    %p31 = scmp.ne.s32.totalorder %s23, %s26
    %p32 = scmp.eq.s32.totalorder %s13, 0
    %p33 = por %p31, %p32
    %p34 = scmp.ne.s32.totalorder %s23, %s26
    %p35 = scmp.eq.s32.totalorder %s18, 1
    %p36 = por %p34, %p35
    %p37 = scmp.ne.s32.totalorder %s26, %s27
    %p38 = scmp.eq.s32.totalorder %s18, 0
    %p39 = por %p37, %p38
    %p40 = scmp.ne.s32.totalorder %s26, %s27
    %p41 = scmp.eq.s32.totalorder %s19, 1
    %p42 = por %p40, %p41
    %p44 = scmp.ne.s32.totalorder %s27, %s43
    %p45 = scmp.eq.s32.totalorder %s19, 0
    %p46 = por %p44, %p45
    %s48 = sadd.s32 %s47, 1
    %p51 = scmp.eq.s32.totalorder %s13, 1
    %p52 = scmp.ne.s32.totalorder %s47, %s49
    %p53 = scmp.eq.s32.totalorder %s13, 0
    %p54 = por %p52, %p53
    %p55 = scmp.ne.s32.totalorder %s47, %s49
    %p56 = scmp.eq.s32.totalorder %s18, 1
    %p57 = por %p55, %p56
    %p58 = scmp.ne.s32.totalorder %s49, %s50
    %p59 = scmp.eq.s32.totalorder %s18, 0
    %p60 = por %p58, %p59
    %p61 = scmp.ne.s32.totalorder %s49, %s50
    %p62 = scmp.eq.s32.totalorder %s19, 1
    %p63 = por %p61, %p62
    %p65 = scmp.ne.s32.totalorder %s50, %s64
    %p66 = scmp.eq.s32.totalorder %s19, 0
    %p67 = por %p65, %p66
    %s69 = sadd.s32 %s68, 1
    %p72 = scmp.eq.s32.totalorder %s13, 1
    %p73 = scmp.ne.s32.totalorder %s68, %s70
    %p74 = scmp.eq.s32.totalorder %s13, 0
    %p75 = por %p73, %p74
    %p76 = scmp.ne.s32.totalorder %s68, %s70
    %p77 = scmp.eq.s32.totalorder %s18, 1
    %p78 = por %p76, %p77
    %p79 = scmp.ne.s32.totalorder %s70, %s71
    %p80 = scmp.eq.s32.totalorder %s18, 0
    %p81 = por %p79, %p80
    %p82 = scmp.ne.s32.totalorder %s70, %s71
    %p83 = scmp.eq.s32.totalorder %s19, 1
    %p84 = por %p82, %p83
    %p86 = scmp.ne.s32.totalorder %s71, %s85
    %p87 = scmp.eq.s32.totalorder %s19, 0
    %p88 = por %p86, %p87
    %s90 = sadd.s32 %s89, 1
    %p93 = scmp.eq.s32.totalorder %s13, 1
    %p94 = scmp.ne.s32.totalorder %s89, %s91
    %p95 = scmp.eq.s32.totalorder %s13, 0
    %p96 = por %p94, %p95
    %p97 = scmp.ne.s32.totalorder %s89, %s91
    %p98 = scmp.eq.s32.totalorder %s18, 1
    %p99 = por %p97, %p98
    %p100 = scmp.ne.s32.totalorder %s91, %s92
    %p101 = scmp.eq.s32.totalorder %s18, 0
    %p102 = por %p100, %p101
    %p103 = scmp.ne.s32.totalorder %s91, %s92
    %p104 = scmp.eq.s32.totalorder %s19, 1
    %p105 = por %p103, %p104
    %p107 = scmp.ne.s32.totalorder %s92, %s106
    %p108 = scmp.eq.s32.totalorder %s19, 0
    %p109 = por %p107, %p108
    %s111 = sadd.s32 %s110, 1
    %p114 = scmp.eq.s32.totalorder %s13, 1
    %p115 = scmp.ne.s32.totalorder %s110, %s112
    %p116 = scmp.eq.s32.totalorder %s13, 0
    %p117 = por %p115, %p116
    %p118 = scmp.ne.s32.totalorder %s110, %s112
    %p119 = scmp.eq.s32.totalorder %s18, 1
    %p120 = por %p118, %p119
    %p121 = scmp.ne.s32.totalorder %s112, %s113
    %p122 = scmp.eq.s32.totalorder %s18, 0
    %p123 = por %p121, %p122
    %p124 = scmp.ne.s32.totalorder %s112, %s113
    %p125 = scmp.eq.s32.totalorder %s19, 1
    %p126 = por %p124, %p125
    %p128 = scmp.ne.s32.totalorder %s113, %s127
    %p129 = scmp.eq.s32.totalorder %s19, 0
    %p130 = por %p128, %p129
    %s132 = sadd.s32 %s131, 1
    %p135 = scmp.eq.s32.totalorder %s13, 1
    %p136 = scmp.ne.s32.totalorder %s131, %s133
    %p137 = scmp.eq.s32.totalorder %s13, 0
    %p138 = por %p136, %p137
    %p139 = scmp.ne.s32.totalorder %s131, %s133
    %p140 = scmp.eq.s32.totalorder %s18, 1
    %p141 = por %p139, %p140
    %p142 = scmp.ne.s32.totalorder %s133, %s134
    %p143 = scmp.eq.s32.totalorder %s18, 0
    %p144 = por %p142, %p143
    %p145 = scmp.ne.s32.totalorder %s133, %s134
    %p146 = scmp.eq.s32.totalorder %s19, 1
    %p147 = por %p145, %p146
    %p149 = scmp.ne.s32.totalorder %s134, %s148
    %p150 = scmp.eq.s32.totalorder %s19, 0
    %p151 = por %p149, %p150
    %s153 = sadd.s32 %s152, 1
    %p156 = scmp.eq.s32.totalorder %s13, 1
    %p157 = scmp.ne.s32.totalorder %s152, %s154
    %p158 = scmp.eq.s32.totalorder %s13, 0
    %p159 = por %p157, %p158
    %p160 = scmp.ne.s32.totalorder %s152, %s154
    %p161 = scmp.eq.s32.totalorder %s18, 1
    %p162 = por %p160, %p161
    %p163 = scmp.ne.s32.totalorder %s154, %s155
    %p164 = scmp.eq.s32.totalorder %s18, 0
    %p165 = por %p163, %p164
    %p166 = scmp.ne.s32.totalorder %s154, %s155
    %p167 = scmp.eq.s32.totalorder %s19, 1
    %p168 = por %p166, %p167
    %p170 = scmp.ne.s32.totalorder %s155, %s169
    %p171 = scmp.eq.s32.totalorder %s19, 0
    %p172 = por %p170, %p171
    %s173 = ssub.s32 %s13, %s20
    %p174 = scmp.eq.s32.totalorder %s173, 0
    %s176 = sadd.s32 %s175, 1
    %s177 = scalar_select %p174, %s175, %s176
    %p180 = pneg %p174
    %p181 = scmp.eq.s32.totalorder %s13, 1
    %p182 = por %p180, %p181
    %p183 = scmp.ne.s32.totalorder %s175, %s178
    %p184 = scmp.eq.s32.totalorder %s13, 0
    %p185 = por %p183, %p184
    %p186 = scmp.ne.s32.totalorder %s175, %s178
    %p187 = scmp.eq.s32.totalorder %s18, 1
    %p188 = por %p186, %p187
    %p189 = scmp.ne.s32.totalorder %s178, %s179
    %p190 = scmp.eq.s32.totalorder %s18, 0
    %p191 = por %p189, %p190
    %p192 = scmp.ne.s32.totalorder %s178, %s179
    %p193 = scmp.eq.s32.totalorder %s19, 1
    %p194 = por %p192, %p193
    %p196 = scmp.ne.s32.totalorder %s179, %s195
    %p197 = scmp.eq.s32.totalorder %s19, 0
    %p198 = por %p196, %p197
    %p199 = scmp.le.s32.totalorder 1, %s13
    %p200 = scmp.lt.s32.totalorder %s13, 3
    %p201 = pnand %p199, %p200
    %p202 = pneg %p201
    // Predicated region
    $region9: #{tpu_custom_call.1} parent=5 // pred_check
      _
    $region10: #{tpu_custom_call.1} parent=5 // pred_check_branch
      %204 = sbr.rel (%p201) target = $region12
    $region11: #{tpu_custom_call.1} parent=5 // pred_region
      %s205 = ssub.s32 %s13, 1
      // Predicated region
      $region13: #{tpu_custom_call.1} parent=11 // pred_check
        %p206 = pneg %p60
      $region14: #{tpu_custom_call.1} parent=11 // pred_check_branch
        %208 = sbr.rel (%p206) target = $region16
      $region15: #{tpu_custom_call.1} parent=11 // pred_region
        _
      $region16: #{tpu_custom_call.1} parent=11 // pred_fallthru
        _
      // Predicated region
      $region17: #{tpu_custom_call.1} parent=11 // pred_check
        %p209 = pneg %p81
      $region18: #{tpu_custom_call.1} parent=11 // pred_check_branch
        %211 = sbr.rel (%p209) target = $region20
      $region19: #{tpu_custom_call.1} parent=11 // pred_region
        _
      $region20: #{tpu_custom_call.1} parent=11 // pred_fallthru
        _
      // Predicated region
      $region21: #{tpu_custom_call.1} parent=11 // pred_check
        %p212 = pneg %p102
      $region22: #{tpu_custom_call.1} parent=11 // pred_check_branch
        %214 = sbr.rel (%p212) target = $region24
      $region23: #{tpu_custom_call.1} parent=11 // pred_region
        _
      $region24: #{tpu_custom_call.1} parent=11 // pred_fallthru
        _
      // Predicated region
      $region25: #{tpu_custom_call.1} parent=11 // pred_check
        %p215 = pneg %p123
      $region26: #{tpu_custom_call.1} parent=11 // pred_check_branch
        %217 = sbr.rel (%p215) target = $region28
      $region27: #{tpu_custom_call.1} parent=11 // pred_region
        _
      $region28: #{tpu_custom_call.1} parent=11 // pred_fallthru
        _
      // Predicated region
      $region29: #{tpu_custom_call.1} parent=11 // pred_check
        %p218 = pneg %p144
      $region30: #{tpu_custom_call.1} parent=11 // pred_check_branch
        %220 = sbr.rel (%p218) target = $region32
      $region31: #{tpu_custom_call.1} parent=11 // pred_region
        _
      $region32: #{tpu_custom_call.1} parent=11 // pred_fallthru
        _
      // Predicated region
      $region33: #{tpu_custom_call.1} parent=11 // pred_check
        %p221 = pneg %p165
      $region34: #{tpu_custom_call.1} parent=11 // pred_check_branch
        %223 = sbr.rel (%p221) target = $region36
      $region35: #{tpu_custom_call.1} parent=11 // pred_region
        _
      $region36: #{tpu_custom_call.1} parent=11 // pred_fallthru
        _
    $region12: #{tpu_custom_call.1} parent=5 // pred_fallthru
      _
    %p224 = scmp.lt.s32.totalorder %s13, 2
    // Predicated region
    $region37: #{tpu_custom_call.1} parent=5 // pred_check
      %p225 = pneg %p224
    $region38: #{tpu_custom_call.1} parent=5 // pred_check_branch
      %227 = sbr.rel (%p225) target = $region40
    $region39: #{tpu_custom_call.1} parent=5 // pred_region
      // Predicated region
      $region41: #{tpu_custom_call.1} parent=39 // pred_check
        %p228 = pneg %p33
      $region42: #{tpu_custom_call.1} parent=39 // pred_check_branch
        %230 = sbr.rel (%p228) target = $region44
      $region43: #{tpu_custom_call.1} parent=39 // pred_region
        %p231 = scmp.lt.s32.totalorder %s13, 1
        %s232 = scalar_select %p231, %s13, 1
        %s233 = smul.addr %s232, 8
        %s234 = smul.addr %s233, 8
        %s235 = scalar_lea.vmem %s0, %s234
      $region44: #{tpu_custom_call.1} parent=39 // pred_fallthru
        _
    $region40: #{tpu_custom_call.1} parent=5 // pred_fallthru
      _
    %p236 = scmp.le.s32.totalorder 1, %s13
    %p237 = scmp.lt.s32.totalorder %s13, 3
    %p238 = pnand %p236, %p237
    %p239 = pneg %p238
    // Predicated region
    $region45: #{tpu_custom_call.1} parent=5 // pred_check
      _
    $region46: #{tpu_custom_call.1} parent=5 // pred_check_branch
      %241 = sbr.rel (%p238) target = $region48
    $region47: #{tpu_custom_call.1} parent=5 // pred_region
      %s242 = ssub.s32 %s13, 1
      %p243 = scmp.lt.s32.totalorder %s18, 1
      %s244 = scalar_select %p243, %s18, 1
      %s245 = smul.addr %s244, 8
      %s246 = smul.addr %s245, 8
      %s247 = scalar_lea.vmem %s0, %s246
      %p248 = pneg %p39
      %p249 = pneg %p36
      %p250 = pneg %p60
      %p251 = pneg %p57
      %p252 = pneg %p81
      %p253 = pneg %p78
      %p254 = pneg %p102
      %p255 = pneg %p99
      %p256 = pneg %p123
      %p257 = pneg %p120
      %p258 = pneg %p144
      %p259 = pneg %p141
      %p260 = pneg %p165
      %p261 = pneg %p162
      %p262 = pneg %p191
      %p263 = pneg %p188
      %p264 = scmp.lt.s32.totalorder %s18, 1
      %s265 = scalar_select %p264, %s18, 1
      %s266 = smul.addr %s265, 8
      %s267 = smul.addr %s266, 8
      %s268 = scalar_lea.vmem %s7, %s267
      %p269 = scmp.lt.s32.totalorder %s18, 1
      %s270 = scalar_select %p269, %s18, 1
      %s271 = smul.addr %s270, 8
      %s272 = smul.addr %s271, 8
      %s273 = scalar_lea.vmem %s0, %s272
      %p274 = scmp.lt.s32.totalorder %s18, 1
      %s275 = scalar_select %p274, %s18, 1
      %s276 = smul.addr %s275, 8
      %s277 = smul.addr %s276, 8
      %s278 = scalar_lea.vmem %s7, %s277
      %v279 = vld [vmem:[%s273] sm:$0xff]
      %v280 = vld [vmem:[%s273 + $0x8] sm:$0xff]
      %v281 = vld [vmem:[%s273 + $0x10] sm:$0xff]
      %v282 = vld [vmem:[%s273 + $0x18] sm:$0xff]
      %v283 = vld [vmem:[%s273 + $0x20] sm:$0xff]
      %v284 = vld [vmem:[%s273 + $0x28] sm:$0xff]
      %v285 = vld [vmem:[%s273 + $0x30] sm:$0xff]
      %v286 = vld [vmem:[%s273 + $0x38] sm:$0xff]
      %v287 = vld [vmem:[%s1] sm:$0xff]
      %v288 = vld [vmem:[%s1 + $0x8] sm:$0xff]
      %v289 = vld [vmem:[%s2] sm:$0x1]
      %v291 = vlaneseq
      %v292 = vshrl.u32 %v291, 7
      %v293 = vsub.s32 0, %v292
      %v294 = vrot.slane %v289, %v293
      %vm296 = vcmask 130048
      %v298 = vsel %vm296, %v279, 0
      %v301 = vsel %vm296, %v280, 0
      %v304 = vsel %vm296, %v281, 0
      %v307 = vsel %vm296, %v282, 0
      %v310 = vsel %vm296, %v283, 0
      %v313 = vsel %vm296, %v284, 0
      %v316 = vsel %vm296, %v285, 0
      %v319 = vsel %vm296, %v286, 0
      %321 = vmatprep.subr.mxu0 0.0
      %322 = vmatpush1.msra.mxu0 %v287
      %323 = vmatprep.subr.mxu0 0.0
      %324 = vmatpush1.msra.mxu0 %v288
      %325 = vmatprep.subr.mxu0 0.0
      %326 = vmatpush1.msra.mxu0 0.0
      %327 = vmatprep.subr.mxu0 0.0
      %328 = vmatpush1.msra.mxu0 0.0
      %329 = vmatprep.subr.mxu0 0.0
      %330 = vmatpush1.msra.mxu0 0.0
      %331 = vmatprep.subr.mxu0 0.0
      %332 = vmatpush1.msra.mxu0 0.0
      %333 = vmatprep.subr.mxu0 0.0
      %334 = vmatpush1.msra.mxu0 0.0
      %335 = vmatprep.subr.mxu0 0.0
      %336 = vmatpush1.msra.mxu0 0.0
      %337 = vmatprep.subr.mxu0 0.0
      %338 = vmatpush1.msra.mxu0 0.0
      %339 = vmatprep.subr.mxu0 0.0
      %340 = vmatpush1.msra.mxu0 0.0
      %341 = vmatprep.subr.mxu0 0.0
      %342 = vmatpush1.msra.mxu0 0.0
      %343 = vmatprep.subr.mxu0 0.0
      %344 = vmatpush1.msra.mxu0 0.0
      %345 = vmatprep.subr.mxu0 0.0
      %346 = vmatpush1.msra.mxu0 0.0
      %347 = vmatprep.subr.mxu0 0.0
      %348 = vmatpush1.msra.mxu0 0.0
      %349 = vmatprep.subr.mxu0 0.0
      %350 = vmatpush1.msra.mxu0 0.0
      %351 = vmatprep.subr.mxu0 0.0
      %352 = vmatpush1.msra.mxu0 0.0
      %353 = vmatprep.subr.mxu0 0.0
      %354 = vmatpush1.msra.mxu0 0.0
      %355 = vmatprep.subr.mxu0 0.0
      %356 = vmatpush1.msra.mxu0 0.0
      %357 = vmatprep.subr.mxu0 0.0
      %358 = vmatpush1.msra.mxu0 0.0
      %359 = vmatprep.subr.mxu0 0.0
      %360 = vmatpush1.msra.mxu0 0.0
      %361 = vmatprep.subr.mxu0 0.0
      %362 = vmatpush1.msra.mxu0 0.0
      %363 = vmatprep.subr.mxu0 0.0
      %364 = vmatpush1.msra.mxu0 0.0
      %365 = vmatprep.subr.mxu0 0.0
      %366 = vmatpush1.msra.mxu0 0.0
      %367 = vmatprep.subr.mxu0 0.0
      %368 = vmatpush1.msra.mxu0 0.0
      %369 = vmatprep.subr.mxu0 0.0
      %370 = vmatpush1.msra.mxu0 0.0
      %371 = vmatprep.subr.mxu0 0.0
      %372 = vmatpush1.msra.mxu0 0.0
      %373 = vmatprep.subr.mxu0 0.0
      %374 = vmatpush1.msra.mxu0 0.0
      %375 = vmatprep.subr.mxu0 0.0
      %376 = vmatpush1.msra.mxu0 0.0
      %377 = vmatprep.subr.mxu0 0.0
      %378 = vmatpush1.msra.mxu0 0.0
      %379 = vmatprep.subr.mxu0 0.0
      %380 = vmatpush1.msra.mxu0 0.0
      %381 = vmatprep.subr.mxu0 0.0
      %382 = vmatpush1.msra.mxu0 0.0
      %383 = vmatprep.subr.mxu0 0.0
      %384 = vmatpush1.msra.mxu0 0.0
      %385 = vmatprep.mubr.f32.mxu0 0.0
      %386 = vmatmul.mubr.f32.gmra.mrb[0].mxu0 %v298
      %v387 = vpop.f32.mrb[0].mxu0
      %v388 = vadd.f32 %v294, %v387
      %v389 = vpop.f32.mrb[0].mxu0
      %390 = vmatprep.mubr.f32.mxu0 0.0
      %391 = vmatmul.mubr.f32.gmra.mrb[0].mxu0 %v301
      %v392 = vpop.f32.mrb[0].mxu0
      %v393 = vadd.f32 %v294, %v392
      %v394 = vpop.f32.mrb[0].mxu0
      %395 = vmatprep.mubr.f32.mxu0 0.0
      %396 = vmatmul.mubr.f32.gmra.mrb[0].mxu0 %v304
      %v397 = vpop.f32.mrb[0].mxu0
      %v398 = vadd.f32 %v294, %v397
      %v399 = vpop.f32.mrb[0].mxu0
      %400 = vmatprep.mubr.f32.mxu0 0.0
      %401 = vmatmul.mubr.f32.gmra.mrb[0].mxu0 %v307
      %v402 = vpop.f32.mrb[0].mxu0
      %v403 = vadd.f32 %v294, %v402
      %v404 = vpop.f32.mrb[0].mxu0
      %405 = vmatprep.mubr.f32.mxu0 0.0
      %406 = vmatmul.mubr.f32.gmra.mrb[0].mxu0 %v310
      %v407 = vpop.f32.mrb[0].mxu0
      %v408 = vadd.f32 %v294, %v407
      %v409 = vpop.f32.mrb[0].mxu0
      %410 = vmatprep.mubr.f32.mxu0 0.0
      %411 = vmatmul.mubr.f32.gmra.mrb[0].mxu0 %v313
      %v412 = vpop.f32.mrb[0].mxu0
      %v413 = vadd.f32 %v294, %v412
      %v414 = vpop.f32.mrb[0].mxu0
      %415 = vmatprep.mubr.f32.mxu0 0.0
      %416 = vmatmul.mubr.f32.gmra.mrb[0].mxu0 %v316
      %v417 = vpop.f32.mrb[0].mxu0
      %v418 = vadd.f32 %v294, %v417
      %v419 = vpop.f32.mrb[0].mxu0
      %420 = vmatprep.mubr.f32.mxu0 0.0
      %421 = vmatmul.mubr.f32.gmra.mrb[0].mxu0 %v319
      %v422 = vpop.f32.mrb[0].mxu0
      %v423 = vadd.f32 %v294, %v422
      %v424 = vpop.f32.mrb[0].mxu0
      %425 = vdwg.mxu0
      %v426 = vmax.f32 %v388, 0.0
      %v427 = vmax.f32 %v393, 0.0
      %v428 = vmax.f32 %v398, 0.0
      %v429 = vmax.f32 %v403, 0.0
      %v430 = vmax.f32 %v408, 0.0
      %v431 = vmax.f32 %v413, 0.0
      %v432 = vmax.f32 %v418, 0.0
      %v433 = vmax.f32 %v423, 0.0
      %v434 = vlaneseq
      %v435 = vshrl.u32 %v434, 7
      %vm436 = vcmp.lt.s32.totalorder %v435, 7
      %v437 = vsel %vm436, 1, 0
      %vm438 = vcmp.eq.s32.totalorder %v437, 1
      %v439 = vsel %vm438, %v426, 0.0
      %v440 = vsel %vm438, %v427, 0.0
      %v441 = vsel %vm438, %v428, 0.0
      %v442 = vsel %vm438, %v429, 0.0
      %v443 = vsel %vm438, %v430, 0.0
      %v444 = vsel %vm438, %v431, 0.0
      %v445 = vsel %vm438, %v432, 0.0
      %v446 = vsel %vm438, %v433, 0.0
      %v447 = vrot.slane %v439, 7
      %v448 = vrot.slane %v440, 7
      %v449 = vrot.slane %v441, 7
      %v450 = vrot.slane %v442, 7
      %v451 = vrot.slane %v443, 7
      %v452 = vrot.slane %v444, 7
      %v453 = vrot.slane %v445, 7
      %v454 = vrot.slane %v446, 7
      %vm455 = vcmp.lt.s32.totalorder %v435, 1
      %v456 = vsel %vm455, %v453, %v454
      %v457 = vsel %vm455, %v452, %v453
      %v458 = vsel %vm455, %v451, %v452
      %v459 = vsel %vm455, %v450, %v451
      %v460 = vsel %vm455, %v449, %v450
      %v461 = vsel %vm455, %v448, %v449
      %v462 = vsel %vm455, %v447, %v448
      %v463 = vsel %vm455, %v454, %v447
      %vm464 = vcmp.ge.s32.totalorder %v435, 1
      %v465 = vsel %vm464, 1, 0
      %vm466 = vcmp.eq.s32.totalorder %v465, 1
      %v467 = vsel %vm466, %v426, 0.0
      %v468 = vsel %vm466, %v427, 0.0
      %v469 = vsel %vm466, %v428, 0.0
      %v470 = vsel %vm466, %v429, 0.0
      %v471 = vsel %vm466, %v430, 0.0
      %v472 = vsel %vm466, %v431, 0.0
      %v473 = vsel %vm466, %v432, 0.0
      %v474 = vsel %vm466, %v433, 0.0
      %v475 = vrot.slane %v467, 1
      %v476 = vrot.slane %v468, 1
      %v477 = vrot.slane %v469, 1
      %v478 = vrot.slane %v470, 1
      %v479 = vrot.slane %v471, 1
      %v480 = vrot.slane %v472, 1
      %v481 = vrot.slane %v473, 1
      %v482 = vrot.slane %v474, 1
      %v483 = vsel %vm436, %v481, %v482
      %v484 = vsel %vm436, %v480, %v481
      %v485 = vsel %vm436, %v479, %v480
      %v486 = vsel %vm436, %v478, %v479
      %v487 = vsel %vm436, %v477, %v478
      %v488 = vsel %vm436, %v476, %v477
      %v489 = vsel %vm436, %v475, %v476
      %v490 = vsel %vm436, %v482, %v475
      %v491 = vld [vmem:[%s3] sm:$0xf]
      %s492 = scalar_lea.vmem %s3, 4
      %v493 = vld [vmem:[%s492] sm:$0xf]
      %vm494 = vcmask 31744
      %v496 = vsel %vm494, 0.0, 0
      %v499 = vsel %vm494, %v426, 0
      %v502 = vsel %vm494, %v427, 0
      %v505 = vsel %vm494, %v428, 0
      %v508 = vsel %vm494, %v429, 0
      %v511 = vsel %vm494, %v430, 0
      %v514 = vsel %vm494, %v431, 0
      %v517 = vsel %vm494, %v432, 0
      %vm519 = vcmask 1043456
      %v521 = vsel %vm519, %v493, 0
      %523 = vmatprep.subr.mxu0 0.0
      %524 = vmatpush1.msra.mxu0 %v521
      %525 = vmatprep.subr.mxu0 0.0
      %526 = vmatpush1.msra.mxu0 0.0
      %527 = vmatprep.subr.mxu0 0.0
      %528 = vmatpush1.msra.mxu0 0.0
      %529 = vmatprep.subr.mxu0 0.0
      %530 = vmatpush1.msra.mxu0 0.0
      %531 = vmatprep.subr.mxu0 0.0
      %532 = vmatpush1.msra.mxu0 0.0
      %533 = vmatprep.subr.mxu0 0.0
      %534 = vmatpush1.msra.mxu0 0.0
      %535 = vmatprep.subr.mxu0 0.0
      %536 = vmatpush1.msra.mxu0 0.0
      %537 = vmatprep.subr.mxu0 0.0
      %538 = vmatpush1.msra.mxu0 0.0
      %539 = vmatprep.subr.mxu0 0.0
      %540 = vmatpush1.msra.mxu0 0.0
      %541 = vmatprep.subr.mxu0 0.0
      %542 = vmatpush1.msra.mxu0 0.0
      %543 = vmatprep.subr.mxu0 0.0
      %544 = vmatpush1.msra.mxu0 0.0
      %545 = vmatprep.subr.mxu0 0.0
      %546 = vmatpush1.msra.mxu0 0.0
      %547 = vmatprep.subr.mxu0 0.0
      %548 = vmatpush1.msra.mxu0 0.0
      %549 = vmatprep.subr.mxu0 0.0
      %550 = vmatpush1.msra.mxu0 0.0
      %551 = vmatprep.subr.mxu0 0.0
      %552 = vmatpush1.msra.mxu0 0.0
      %553 = vmatprep.subr.mxu0 0.0
      %554 = vmatpush1.msra.mxu0 0.0
      %555 = vmatprep.subr.mxu0 0.0
      %556 = vmatpush1.msra.mxu0 0.0
      %557 = vmatprep.subr.mxu0 0.0
      %558 = vmatpush1.msra.mxu0 0.0
      %559 = vmatprep.subr.mxu0 0.0
      %560 = vmatpush1.msra.mxu0 0.0
      %561 = vmatprep.subr.mxu0 0.0
      %562 = vmatpush1.msra.mxu0 0.0
      %563 = vmatprep.subr.mxu0 0.0
      %564 = vmatpush1.msra.mxu0 0.0
      %565 = vmatprep.subr.mxu0 0.0
      %566 = vmatpush1.msra.mxu0 0.0
      %567 = vmatprep.subr.mxu0 0.0
      %568 = vmatpush1.msra.mxu0 0.0
      %569 = vmatprep.subr.mxu0 0.0
      %570 = vmatpush1.msra.mxu0 0.0
      %571 = vmatprep.subr.mxu0 0.0
      %572 = vmatpush1.msra.mxu0 0.0
      %573 = vmatprep.subr.mxu0 0.0
      %574 = vmatpush1.msra.mxu0 0.0
      %575 = vmatprep.subr.mxu0 0.0
      %576 = vmatpush1.msra.mxu0 0.0
      %577 = vmatprep.subr.mxu0 0.0
      %578 = vmatpush1.msra.mxu0 0.0
      %579 = vmatprep.subr.mxu0 0.0
      %580 = vmatpush1.msra.mxu0 0.0
      %581 = vmatprep.subr.mxu0 0.0
      %582 = vmatpush1.msra.mxu0 0.0
      %583 = vmatprep.subr.mxu0 0.0
      %584 = vmatpush1.msra.mxu0 0.0
      %585 = vmatprep.subr.mxu0 0.0
      %586 = vmatpush1.msra.mxu0 0.0
      %587 = vmatprep.mubr.f32.mxu0 0.0
      %588 = vmatmul.mubr.f32.gmra.mrb[0].mxu0 %v496
      %v589 = vpop.f32.mrb[0].mxu0
      %v590 = vadd.f32 0.0, %v589
      %v591 = vpop.f32.mrb[0].mxu0
      %592 = vmatprep.mubr.f32.mxu0 0.0
      %593 = vmatmul.mubr.f32.gmra.mrb[0].mxu0 %v499
      %v594 = vpop.f32.mrb[0].mxu0
      %v595 = vadd.f32 0.0, %v594
      %v596 = vpop.f32.mrb[0].mxu0
      %597 = vmatprep.mubr.f32.mxu0 0.0
      %598 = vmatmul.mubr.f32.gmra.mrb[0].mxu0 %v502
      %v599 = vpop.f32.mrb[0].mxu0
      %v600 = vadd.f32 0.0, %v599
      %v601 = vpop.f32.mrb[0].mxu0
      %602 = vmatprep.mubr.f32.mxu0 0.0
      %603 = vmatmul.mubr.f32.gmra.mrb[0].mxu0 %v505
      %v604 = vpop.f32.mrb[0].mxu0
      %v605 = vadd.f32 0.0, %v604
      %v606 = vpop.f32.mrb[0].mxu0
      %607 = vmatprep.mubr.f32.mxu0 0.0
      %608 = vmatmul.mubr.f32.gmra.mrb[0].mxu0 %v508
      %v609 = vpop.f32.mrb[0].mxu0
      %v610 = vadd.f32 0.0, %v609
      %v611 = vpop.f32.mrb[0].mxu0
      %612 = vmatprep.mubr.f32.mxu0 0.0
      %613 = vmatmul.mubr.f32.gmra.mrb[0].mxu0 %v511
      %v614 = vpop.f32.mrb[0].mxu0
      %v615 = vadd.f32 0.0, %v614
      %v616 = vpop.f32.mrb[0].mxu0
      %617 = vmatprep.mubr.f32.mxu0 0.0
      %618 = vmatmul.mubr.f32.gmra.mrb[0].mxu0 %v514
      %v619 = vpop.f32.mrb[0].mxu0
      %v620 = vadd.f32 0.0, %v619
      %v621 = vpop.f32.mrb[0].mxu0
      %622 = vmatprep.mubr.f32.mxu0 0.0
      %623 = vmatmul.mubr.f32.gmra.mrb[0].mxu0 %v517
      %v624 = vpop.f32.mrb[0].mxu0
      %v625 = vadd.f32 0.0, %v624
      %v626 = vpop.f32.mrb[0].mxu0
      %627 = vdwg.mxu0
      %v629 = vsel %vm494, %v463, 0
      %v632 = vsel %vm494, %v462, 0
      %v635 = vsel %vm494, %v461, 0
      %v638 = vsel %vm494, %v460, 0
      %v641 = vsel %vm494, %v459, 0
      %v644 = vsel %vm494, %v458, 0
      %v647 = vsel %vm494, %v457, 0
      %v650 = vsel %vm519, %v491, 0
      %652 = vmatprep.subr.mxu0 0.0
      %653 = vmatpush1.msra.mxu0 %v650
      %654 = vmatprep.subr.mxu0 0.0
      %655 = vmatpush1.msra.mxu0 0.0
      %656 = vmatprep.subr.mxu0 0.0
      %657 = vmatpush1.msra.mxu0 0.0
      %658 = vmatprep.subr.mxu0 0.0
      %659 = vmatpush1.msra.mxu0 0.0
      %660 = vmatprep.subr.mxu0 0.0
      %661 = vmatpush1.msra.mxu0 0.0
      %662 = vmatprep.subr.mxu0 0.0
      %663 = vmatpush1.msra.mxu0 0.0
      %664 = vmatprep.subr.mxu0 0.0
      %665 = vmatpush1.msra.mxu0 0.0
      %666 = vmatprep.subr.mxu0 0.0
      %667 = vmatpush1.msra.mxu0 0.0
      %668 = vmatprep.subr.mxu0 0.0
      %669 = vmatpush1.msra.mxu0 0.0
      %670 = vmatprep.subr.mxu0 0.0
      %671 = vmatpush1.msra.mxu0 0.0
      %672 = vmatprep.subr.mxu0 0.0
      %673 = vmatpush1.msra.mxu0 0.0
      %674 = vmatprep.subr.mxu0 0.0
      %675 = vmatpush1.msra.mxu0 0.0
      %676 = vmatprep.subr.mxu0 0.0
      %677 = vmatpush1.msra.mxu0 0.0
      %678 = vmatprep.subr.mxu0 0.0
      %679 = vmatpush1.msra.mxu0 0.0
      %680 = vmatprep.subr.mxu0 0.0
      %681 = vmatpush1.msra.mxu0 0.0
      %682 = vmatprep.subr.mxu0 0.0
      %683 = vmatpush1.msra.mxu0 0.0
      %684 = vmatprep.subr.mxu0 0.0
      %685 = vmatpush1.msra.mxu0 0.0
      %686 = vmatprep.subr.mxu0 0.0
      %687 = vmatpush1.msra.mxu0 0.0
      %688 = vmatprep.subr.mxu0 0.0
      %689 = vmatpush1.msra.mxu0 0.0
      %690 = vmatprep.subr.mxu0 0.0
      %691 = vmatpush1.msra.mxu0 0.0
      %692 = vmatprep.subr.mxu0 0.0
      %693 = vmatpush1.msra.mxu0 0.0
      %694 = vmatprep.subr.mxu0 0.0
      %695 = vmatpush1.msra.mxu0 0.0
      %696 = vmatprep.subr.mxu0 0.0
      %697 = vmatpush1.msra.mxu0 0.0
      %698 = vmatprep.subr.mxu0 0.0
      %699 = vmatpush1.msra.mxu0 0.0
      %700 = vmatprep.subr.mxu0 0.0
      %701 = vmatpush1.msra.mxu0 0.0
      %702 = vmatprep.subr.mxu0 0.0
      %703 = vmatpush1.msra.mxu0 0.0
      %704 = vmatprep.subr.mxu0 0.0
      %705 = vmatpush1.msra.mxu0 0.0
      %706 = vmatprep.subr.mxu0 0.0
      %707 = vmatpush1.msra.mxu0 0.0
      %708 = vmatprep.subr.mxu0 0.0
      %709 = vmatpush1.msra.mxu0 0.0
      %710 = vmatprep.subr.mxu0 0.0
      %711 = vmatpush1.msra.mxu0 0.0
      %712 = vmatprep.subr.mxu0 0.0
      %713 = vmatpush1.msra.mxu0 0.0
      %714 = vmatprep.subr.mxu0 0.0
      %715 = vmatpush1.msra.mxu0 0.0
      %716 = vmatprep.mubr.f32.mxu0 0.0
      %717 = vmatmul.mubr.f32.gmra.mrb[0].mxu0 %v496
      %v718 = vpop.f32.mrb[0].mxu0
      %v719 = vadd.f32 %v590, %v718
      %v720 = vpop.f32.mrb[0].mxu0
      %721 = vmatprep.mubr.f32.mxu0 0.0
      %722 = vmatmul.mubr.f32.gmra.mrb[0].mxu0 %v629
      %v723 = vpop.f32.mrb[0].mxu0
      %v724 = vadd.f32 %v595, %v723
      %v725 = vpop.f32.mrb[0].mxu0
      %726 = vmatprep.mubr.f32.mxu0 0.0
      %727 = vmatmul.mubr.f32.gmra.mrb[0].mxu0 %v632
      %v728 = vpop.f32.mrb[0].mxu0
      %v729 = vadd.f32 %v600, %v728
      %v730 = vpop.f32.mrb[0].mxu0
      %731 = vmatprep.mubr.f32.mxu0 0.0
      %732 = vmatmul.mubr.f32.gmra.mrb[0].mxu0 %v635
      %v733 = vpop.f32.mrb[0].mxu0
      %v734 = vadd.f32 %v605, %v733
      %v735 = vpop.f32.mrb[0].mxu0
      %736 = vmatprep.mubr.f32.mxu0 0.0
      %737 = vmatmul.mubr.f32.gmra.mrb[0].mxu0 %v638
      %v738 = vpop.f32.mrb[0].mxu0
      %v739 = vadd.f32 %v610, %v738
      %v740 = vpop.f32.mrb[0].mxu0
      %741 = vmatprep.mubr.f32.mxu0 0.0
      %742 = vmatmul.mubr.f32.gmra.mrb[0].mxu0 %v641
      %v743 = vpop.f32.mrb[0].mxu0
      %v744 = vadd.f32 %v615, %v743
      %v745 = vpop.f32.mrb[0].mxu0
      %746 = vmatprep.mubr.f32.mxu0 0.0
      %747 = vmatmul.mubr.f32.gmra.mrb[0].mxu0 %v644
      %v748 = vpop.f32.mrb[0].mxu0
      %v749 = vadd.f32 %v620, %v748
      %v750 = vpop.f32.mrb[0].mxu0
      %751 = vmatprep.mubr.f32.mxu0 0.0
      %752 = vmatmul.mubr.f32.gmra.mrb[0].mxu0 %v647
      %v753 = vpop.f32.mrb[0].mxu0
      %v754 = vadd.f32 %v625, %v753
      %v755 = vpop.f32.mrb[0].mxu0
      %756 = vdwg.mxu0
      %s757 = scalar_lea.vmem %s3, 8
      %v758 = vld [vmem:[%s757] sm:$0xf]
      %v760 = vsel %vm494, %v489, 0
      %v763 = vsel %vm494, %v488, 0
      %v766 = vsel %vm494, %v487, 0
      %v769 = vsel %vm494, %v486, 0
      %v772 = vsel %vm494, %v485, 0
      %v775 = vsel %vm494, %v484, 0
      %v778 = vsel %vm494, %v483, 0
      %v781 = vsel %vm519, %v758, 0
      %783 = vmatprep.subr.mxu0 0.0
      %784 = vmatpush1.msra.mxu0 %v781
      %785 = vmatprep.subr.mxu0 0.0
      %786 = vmatpush1.msra.mxu0 0.0
      %787 = vmatprep.subr.mxu0 0.0
      %788 = vmatpush1.msra.mxu0 0.0
      %789 = vmatprep.subr.mxu0 0.0
      %790 = vmatpush1.msra.mxu0 0.0
      %791 = vmatprep.subr.mxu0 0.0
      %792 = vmatpush1.msra.mxu0 0.0
      %793 = vmatprep.subr.mxu0 0.0
      %794 = vmatpush1.msra.mxu0 0.0
      %795 = vmatprep.subr.mxu0 0.0
      %796 = vmatpush1.msra.mxu0 0.0
      %797 = vmatprep.subr.mxu0 0.0
      %798 = vmatpush1.msra.mxu0 0.0
      %799 = vmatprep.subr.mxu0 0.0
      %800 = vmatpush1.msra.mxu0 0.0
      %801 = vmatprep.subr.mxu0 0.0
      %802 = vmatpush1.msra.mxu0 0.0
      %803 = vmatprep.subr.mxu0 0.0
      %804 = vmatpush1.msra.mxu0 0.0
      %805 = vmatprep.subr.mxu0 0.0
      %806 = vmatpush1.msra.mxu0 0.0
      %807 = vmatprep.subr.mxu0 0.0
      %808 = vmatpush1.msra.mxu0 0.0
      %809 = vmatprep.subr.mxu0 0.0
      %810 = vmatpush1.msra.mxu0 0.0
      %811 = vmatprep.subr.mxu0 0.0
      %812 = vmatpush1.msra.mxu0 0.0
      %813 = vmatprep.subr.mxu0 0.0
      %814 = vmatpush1.msra.mxu0 0.0
      %815 = vmatprep.subr.mxu0 0.0
      %816 = vmatpush1.msra.mxu0 0.0
      %817 = vmatprep.subr.mxu0 0.0
      %818 = vmatpush1.msra.mxu0 0.0
      %819 = vmatprep.subr.mxu0 0.0
      %820 = vmatpush1.msra.mxu0 0.0
      %821 = vmatprep.subr.mxu0 0.0
      %822 = vmatpush1.msra.mxu0 0.0
      %823 = vmatprep.subr.mxu0 0.0
      %824 = vmatpush1.msra.mxu0 0.0
      %825 = vmatprep.subr.mxu0 0.0
      %826 = vmatpush1.msra.mxu0 0.0
      %827 = vmatprep.subr.mxu0 0.0
      %828 = vmatpush1.msra.mxu0 0.0
      %829 = vmatprep.subr.mxu0 0.0
      %830 = vmatpush1.msra.mxu0 0.0
      %831 = vmatprep.subr.mxu0 0.0
      %832 = vmatpush1.msra.mxu0 0.0
      %833 = vmatprep.subr.mxu0 0.0
      %834 = vmatpush1.msra.mxu0 0.0
      %835 = vmatprep.subr.mxu0 0.0
      %836 = vmatpush1.msra.mxu0 0.0
      %837 = vmatprep.subr.mxu0 0.0
      %838 = vmatpush1.msra.mxu0 0.0
      %839 = vmatprep.subr.mxu0 0.0
      %840 = vmatpush1.msra.mxu0 0.0
      %841 = vmatprep.subr.mxu0 0.0
      %842 = vmatpush1.msra.mxu0 0.0
      %843 = vmatprep.subr.mxu0 0.0
      %844 = vmatpush1.msra.mxu0 0.0
      %845 = vmatprep.subr.mxu0 0.0
      %846 = vmatpush1.msra.mxu0 0.0
      %847 = vmatprep.mubr.f32.mxu0 0.0
      %848 = vmatmul.mubr.f32.gmra.mrb[0].mxu0 %v496
      %v849 = vpop.f32.mrb[0].mxu0
      %v850 = vadd.f32 0.0, %v849
      %v851 = vpop.f32.mrb[0].mxu0
      %852 = vmatprep.mubr.f32.mxu0 0.0
      %853 = vmatmul.mubr.f32.gmra.mrb[0].mxu0 %v760
      %v854 = vpop.f32.mrb[0].mxu0
      %v855 = vadd.f32 0.0, %v854
      %v856 = vpop.f32.mrb[0].mxu0
      %857 = vmatprep.mubr.f32.mxu0 0.0
      %858 = vmatmul.mubr.f32.gmra.mrb[0].mxu0 %v763
      %v859 = vpop.f32.mrb[0].mxu0
      %v860 = vadd.f32 0.0, %v859
      %v861 = vpop.f32.mrb[0].mxu0
      %862 = vmatprep.mubr.f32.mxu0 0.0
      %863 = vmatmul.mubr.f32.gmra.mrb[0].mxu0 %v766
      %v864 = vpop.f32.mrb[0].mxu0
      %v865 = vadd.f32 0.0, %v864
      %v866 = vpop.f32.mrb[0].mxu0
      %867 = vmatprep.mubr.f32.mxu0 0.0
      %868 = vmatmul.mubr.f32.gmra.mrb[0].mxu0 %v769
      %v869 = vpop.f32.mrb[0].mxu0
      %v870 = vadd.f32 0.0, %v869
      %v871 = vpop.f32.mrb[0].mxu0
      %872 = vmatprep.mubr.f32.mxu0 0.0
      %873 = vmatmul.mubr.f32.gmra.mrb[0].mxu0 %v772
      %v874 = vpop.f32.mrb[0].mxu0
      %v875 = vadd.f32 0.0, %v874
      %v876 = vpop.f32.mrb[0].mxu0
      %877 = vmatprep.mubr.f32.mxu0 0.0
      %878 = vmatmul.mubr.f32.gmra.mrb[0].mxu0 %v775
      %v879 = vpop.f32.mrb[0].mxu0
      %v880 = vadd.f32 0.0, %v879
      %v881 = vpop.f32.mrb[0].mxu0
      %882 = vmatprep.mubr.f32.mxu0 0.0
      %883 = vmatmul.mubr.f32.gmra.mrb[0].mxu0 %v778
      %v884 = vpop.f32.mrb[0].mxu0
      %v885 = vadd.f32 0.0, %v884
      %v886 = vpop.f32.mrb[0].mxu0
      %887 = vdwg.mxu0
      %v888 = vadd.f32 %v719, %v850
      %v889 = vadd.f32 %v724, %v855
      %v890 = vadd.f32 %v729, %v860
      %v891 = vadd.f32 %v734, %v865
      %v892 = vadd.f32 %v739, %v870
      %v893 = vadd.f32 %v744, %v875
      %v894 = vadd.f32 %v749, %v880
      %v895 = vadd.f32 %v754, %v885
      %s896 = scalar_lea.vmem %s3, 12
      %v897 = vld [vmem:[%s896] sm:$0xf]
      %v899 = vsel %vm494, %v456, 0
      %v902 = vsel %vm519, %v897, 0
      %904 = vmatprep.subr.mxu0 0.0
      %905 = vmatpush1.msra.mxu0 %v902
      %906 = vmatprep.subr.mxu0 0.0
      %907 = vmatpush1.msra.mxu0 0.0
      %908 = vmatprep.subr.mxu0 0.0
      %909 = vmatpush1.msra.mxu0 0.0
      %910 = vmatprep.subr.mxu0 0.0
      %911 = vmatpush1.msra.mxu0 0.0
      %912 = vmatprep.subr.mxu0 0.0
      %913 = vmatpush1.msra.mxu0 0.0
      %914 = vmatprep.subr.mxu0 0.0
      %915 = vmatpush1.msra.mxu0 0.0
      %916 = vmatprep.subr.mxu0 0.0
      %917 = vmatpush1.msra.mxu0 0.0
      %918 = vmatprep.subr.mxu0 0.0
      %919 = vmatpush1.msra.mxu0 0.0
      %920 = vmatprep.subr.mxu0 0.0
      %921 = vmatpush1.msra.mxu0 0.0
      %922 = vmatprep.subr.mxu0 0.0
      %923 = vmatpush1.msra.mxu0 0.0
      %924 = vmatprep.subr.mxu0 0.0
      %925 = vmatpush1.msra.mxu0 0.0
      %926 = vmatprep.subr.mxu0 0.0
      %927 = vmatpush1.msra.mxu0 0.0
      %928 = vmatprep.subr.mxu0 0.0
      %929 = vmatpush1.msra.mxu0 0.0
      %930 = vmatprep.subr.mxu0 0.0
      %931 = vmatpush1.msra.mxu0 0.0
      %932 = vmatprep.subr.mxu0 0.0
      %933 = vmatpush1.msra.mxu0 0.0
      %934 = vmatprep.subr.mxu0 0.0
      %935 = vmatpush1.msra.mxu0 0.0
      %936 = vmatprep.subr.mxu0 0.0
      %937 = vmatpush1.msra.mxu0 0.0
      %938 = vmatprep.subr.mxu0 0.0
      %939 = vmatpush1.msra.mxu0 0.0
      %940 = vmatprep.subr.mxu0 0.0
      %941 = vmatpush1.msra.mxu0 0.0
      %942 = vmatprep.subr.mxu0 0.0
      %943 = vmatpush1.msra.mxu0 0.0
      %944 = vmatprep.subr.mxu0 0.0
      %945 = vmatpush1.msra.mxu0 0.0
      %946 = vmatprep.subr.mxu0 0.0
      %947 = vmatpush1.msra.mxu0 0.0
      %948 = vmatprep.subr.mxu0 0.0
      %949 = vmatpush1.msra.mxu0 0.0
      %950 = vmatprep.subr.mxu0 0.0
      %951 = vmatpush1.msra.mxu0 0.0
      %952 = vmatprep.subr.mxu0 0.0
      %953 = vmatpush1.msra.mxu0 0.0
      %954 = vmatprep.subr.mxu0 0.0
      %955 = vmatpush1.msra.mxu0 0.0
      %956 = vmatprep.subr.mxu0 0.0
      %957 = vmatpush1.msra.mxu0 0.0
      %958 = vmatprep.subr.mxu0 0.0
      %959 = vmatpush1.msra.mxu0 0.0
      %960 = vmatprep.subr.mxu0 0.0
      %961 = vmatpush1.msra.mxu0 0.0
      %962 = vmatprep.subr.mxu0 0.0
      %963 = vmatpush1.msra.mxu0 0.0
      %964 = vmatprep.subr.mxu0 0.0
      %965 = vmatpush1.msra.mxu0 0.0
      %966 = vmatprep.subr.mxu0 0.0
      %967 = vmatpush1.msra.mxu0 0.0
      %968 = vmatprep.mubr.f32.mxu0 0.0
      %969 = vmatmul.mubr.f32.gmra.mrb[0].mxu0 %v629
      %v970 = vpop.f32.mrb[0].mxu0
      %v971 = vadd.f32 0.0, %v970
      %v972 = vpop.f32.mrb[0].mxu0
      %973 = vmatprep.mubr.f32.mxu0 0.0
      %974 = vmatmul.mubr.f32.gmra.mrb[0].mxu0 %v632
      %v975 = vpop.f32.mrb[0].mxu0
      %v976 = vadd.f32 0.0, %v975
      %v977 = vpop.f32.mrb[0].mxu0
      %978 = vmatprep.mubr.f32.mxu0 0.0
      %979 = vmatmul.mubr.f32.gmra.mrb[0].mxu0 %v635
      %v980 = vpop.f32.mrb[0].mxu0
      %v981 = vadd.f32 0.0, %v980
      %v982 = vpop.f32.mrb[0].mxu0
      %983 = vmatprep.mubr.f32.mxu0 0.0
      %984 = vmatmul.mubr.f32.gmra.mrb[0].mxu0 %v638
      %v985 = vpop.f32.mrb[0].mxu0
      %v986 = vadd.f32 0.0, %v985
      %v987 = vpop.f32.mrb[0].mxu0
      %988 = vmatprep.mubr.f32.mxu0 0.0
      %989 = vmatmul.mubr.f32.gmra.mrb[0].mxu0 %v641
      %v990 = vpop.f32.mrb[0].mxu0
      %v991 = vadd.f32 0.0, %v990
      %v992 = vpop.f32.mrb[0].mxu0
      %993 = vmatprep.mubr.f32.mxu0 0.0
      %994 = vmatmul.mubr.f32.gmra.mrb[0].mxu0 %v644
      %v995 = vpop.f32.mrb[0].mxu0
      %v996 = vadd.f32 0.0, %v995
      %v997 = vpop.f32.mrb[0].mxu0
      %998 = vmatprep.mubr.f32.mxu0 0.0
      %999 = vmatmul.mubr.f32.gmra.mrb[0].mxu0 %v647
      %v1000 = vpop.f32.mrb[0].mxu0
      %v1001 = vadd.f32 0.0, %v1000
      %v1002 = vpop.f32.mrb[0].mxu0
      %1003 = vmatprep.mubr.f32.mxu0 0.0
      %1004 = vmatmul.mubr.f32.gmra.mrb[0].mxu0 %v899
      %v1005 = vpop.f32.mrb[0].mxu0
      %v1006 = vadd.f32 0.0, %v1005
      %v1007 = vpop.f32.mrb[0].mxu0
      %1008 = vdwg.mxu0
      %v1009 = vadd.f32 %v888, %v971
      %v1010 = vadd.f32 %v889, %v976
      %v1011 = vadd.f32 %v890, %v981
      %v1012 = vadd.f32 %v891, %v986
      %v1013 = vadd.f32 %v892, %v991
      %v1014 = vadd.f32 %v893, %v996
      %v1015 = vadd.f32 %v894, %v1001
      %v1016 = vadd.f32 %v895, %v1006
      %s1017 = scalar_lea.vmem %s3, 16
      %v1018 = vld [vmem:[%s1017] sm:$0xf]
      %v1020 = vsel %vm494, %v433, 0
      %v1023 = vsel %vm519, %v1018, 0
      %1025 = vmatprep.subr.mxu0 0.0
      %1026 = vmatpush1.msra.mxu0 %v1023
      %1027 = vmatprep.subr.mxu0 0.0
      %1028 = vmatpush1.msra.mxu0 0.0
      %1029 = vmatprep.subr.mxu0 0.0
      %1030 = vmatpush1.msra.mxu0 0.0
      %1031 = vmatprep.subr.mxu0 0.0
      %1032 = vmatpush1.msra.mxu0 0.0
      %1033 = vmatprep.subr.mxu0 0.0
      %1034 = vmatpush1.msra.mxu0 0.0
      %1035 = vmatprep.subr.mxu0 0.0
      %1036 = vmatpush1.msra.mxu0 0.0
      %1037 = vmatprep.subr.mxu0 0.0
      %1038 = vmatpush1.msra.mxu0 0.0
      %1039 = vmatprep.subr.mxu0 0.0
      %1040 = vmatpush1.msra.mxu0 0.0
      %1041 = vmatprep.subr.mxu0 0.0
      %1042 = vmatpush1.msra.mxu0 0.0
      %1043 = vmatprep.subr.mxu0 0.0
      %1044 = vmatpush1.msra.mxu0 0.0
      %1045 = vmatprep.subr.mxu0 0.0
      %1046 = vmatpush1.msra.mxu0 0.0
      %1047 = vmatprep.subr.mxu0 0.0
      %1048 = vmatpush1.msra.mxu0 0.0
      %1049 = vmatprep.subr.mxu0 0.0
      %1050 = vmatpush1.msra.mxu0 0.0
      %1051 = vmatprep.subr.mxu0 0.0
      %1052 = vmatpush1.msra.mxu0 0.0
      %1053 = vmatprep.subr.mxu0 0.0
      %1054 = vmatpush1.msra.mxu0 0.0
      %1055 = vmatprep.subr.mxu0 0.0
      %1056 = vmatpush1.msra.mxu0 0.0
      %1057 = vmatprep.subr.mxu0 0.0
      %1058 = vmatpush1.msra.mxu0 0.0
      %1059 = vmatprep.subr.mxu0 0.0
      %1060 = vmatpush1.msra.mxu0 0.0
      %1061 = vmatprep.subr.mxu0 0.0
      %1062 = vmatpush1.msra.mxu0 0.0
      %1063 = vmatprep.subr.mxu0 0.0
      %1064 = vmatpush1.msra.mxu0 0.0
      %1065 = vmatprep.subr.mxu0 0.0
      %1066 = vmatpush1.msra.mxu0 0.0
      %1067 = vmatprep.subr.mxu0 0.0
      %1068 = vmatpush1.msra.mxu0 0.0
      %1069 = vmatprep.subr.mxu0 0.0
      %1070 = vmatpush1.msra.mxu0 0.0
      %1071 = vmatprep.subr.mxu0 0.0
      %1072 = vmatpush1.msra.mxu0 0.0
      %1073 = vmatprep.subr.mxu0 0.0
      %1074 = vmatpush1.msra.mxu0 0.0
      %1075 = vmatprep.subr.mxu0 0.0
      %1076 = vmatpush1.msra.mxu0 0.0
      %1077 = vmatprep.subr.mxu0 0.0
      %1078 = vmatpush1.msra.mxu0 0.0
      %1079 = vmatprep.subr.mxu0 0.0
      %1080 = vmatpush1.msra.mxu0 0.0
      %1081 = vmatprep.subr.mxu0 0.0
      %1082 = vmatpush1.msra.mxu0 0.0
      %1083 = vmatprep.subr.mxu0 0.0
      %1084 = vmatpush1.msra.mxu0 0.0
      %1085 = vmatprep.subr.mxu0 0.0
      %1086 = vmatpush1.msra.mxu0 0.0
      %1087 = vmatprep.subr.mxu0 0.0
      %1088 = vmatpush1.msra.mxu0 0.0
      %1089 = vmatprep.mubr.f32.mxu0 0.0
      %1090 = vmatmul.mubr.f32.gmra.mrb[0].mxu0 %v499
      %v1091 = vpop.f32.mrb[0].mxu0
      %v1092 = vadd.f32 0.0, %v1091
      %v1093 = vpop.f32.mrb[0].mxu0
      %1094 = vmatprep.mubr.f32.mxu0 0.0
      %1095 = vmatmul.mubr.f32.gmra.mrb[0].mxu0 %v502
      %v1096 = vpop.f32.mrb[0].mxu0
      %v1097 = vadd.f32 0.0, %v1096
      %v1098 = vpop.f32.mrb[0].mxu0
      %1099 = vmatprep.mubr.f32.mxu0 0.0
      %1100 = vmatmul.mubr.f32.gmra.mrb[0].mxu0 %v505
      %v1101 = vpop.f32.mrb[0].mxu0
      %v1102 = vadd.f32 0.0, %v1101
      %v1103 = vpop.f32.mrb[0].mxu0
      %1104 = vmatprep.mubr.f32.mxu0 0.0
      %1105 = vmatmul.mubr.f32.gmra.mrb[0].mxu0 %v508
      %v1106 = vpop.f32.mrb[0].mxu0
      %v1107 = vadd.f32 0.0, %v1106
      %v1108 = vpop.f32.mrb[0].mxu0
      %1109 = vmatprep.mubr.f32.mxu0 0.0
      %1110 = vmatmul.mubr.f32.gmra.mrb[0].mxu0 %v511
      %v1111 = vpop.f32.mrb[0].mxu0
      %v1112 = vadd.f32 0.0, %v1111
      %v1113 = vpop.f32.mrb[0].mxu0
      %1114 = vmatprep.mubr.f32.mxu0 0.0
      %1115 = vmatmul.mubr.f32.gmra.mrb[0].mxu0 %v514
      %v1116 = vpop.f32.mrb[0].mxu0
      %v1117 = vadd.f32 0.0, %v1116
      %v1118 = vpop.f32.mrb[0].mxu0
      %1119 = vmatprep.mubr.f32.mxu0 0.0
      %1120 = vmatmul.mubr.f32.gmra.mrb[0].mxu0 %v517
      %v1121 = vpop.f32.mrb[0].mxu0
      %v1122 = vadd.f32 0.0, %v1121
      %v1123 = vpop.f32.mrb[0].mxu0
      %1124 = vmatprep.mubr.f32.mxu0 0.0
      %1125 = vmatmul.mubr.f32.gmra.mrb[0].mxu0 %v1020
      %v1126 = vpop.f32.mrb[0].mxu0
      %v1127 = vadd.f32 0.0, %v1126
      %v1128 = vpop.f32.mrb[0].mxu0
      %1129 = vdwg.mxu0
      %v1130 = vadd.f32 %v1009, %v1092
      %v1131 = vadd.f32 %v1010, %v1097
      %v1132 = vadd.f32 %v1011, %v1102
      %v1133 = vadd.f32 %v1012, %v1107
      %v1134 = vadd.f32 %v1013, %v1112
      %v1135 = vadd.f32 %v1014, %v1117
      %v1136 = vadd.f32 %v1015, %v1122
      %v1137 = vadd.f32 %v1016, %v1127
      %s1138 = scalar_lea.vmem %s3, 20
      %v1139 = vld [vmem:[%s1138] sm:$0xf]
      %v1141 = vsel %vm494, %v490, 0
      %v1144 = vsel %vm519, %v1139, 0
      %1146 = vmatprep.subr.mxu0 0.0
      %1147 = vmatpush1.msra.mxu0 %v1144
      %1148 = vmatprep.subr.mxu0 0.0
      %1149 = vmatpush1.msra.mxu0 0.0
      %1150 = vmatprep.subr.mxu0 0.0
      %1151 = vmatpush1.msra.mxu0 0.0
      %1152 = vmatprep.subr.mxu0 0.0
      %1153 = vmatpush1.msra.mxu0 0.0
      %1154 = vmatprep.subr.mxu0 0.0
      %1155 = vmatpush1.msra.mxu0 0.0
      %1156 = vmatprep.subr.mxu0 0.0
      %1157 = vmatpush1.msra.mxu0 0.0
      %1158 = vmatprep.subr.mxu0 0.0
      %1159 = vmatpush1.msra.mxu0 0.0
      %1160 = vmatprep.subr.mxu0 0.0
      %1161 = vmatpush1.msra.mxu0 0.0
      %1162 = vmatprep.subr.mxu0 0.0
      %1163 = vmatpush1.msra.mxu0 0.0
      %1164 = vmatprep.subr.mxu0 0.0
      %1165 = vmatpush1.msra.mxu0 0.0
      %1166 = vmatprep.subr.mxu0 0.0
      %1167 = vmatpush1.msra.mxu0 0.0
      %1168 = vmatprep.subr.mxu0 0.0
      %1169 = vmatpush1.msra.mxu0 0.0
      %1170 = vmatprep.subr.mxu0 0.0
      %1171 = vmatpush1.msra.mxu0 0.0
      %1172 = vmatprep.subr.mxu0 0.0
      %1173 = vmatpush1.msra.mxu0 0.0
      %1174 = vmatprep.subr.mxu0 0.0
      %1175 = vmatpush1.msra.mxu0 0.0
      %1176 = vmatprep.subr.mxu0 0.0
      %1177 = vmatpush1.msra.mxu0 0.0
      %1178 = vmatprep.subr.mxu0 0.0
      %1179 = vmatpush1.msra.mxu0 0.0
      %1180 = vmatprep.subr.mxu0 0.0
      %1181 = vmatpush1.msra.mxu0 0.0
      %1182 = vmatprep.subr.mxu0 0.0
      %1183 = vmatpush1.msra.mxu0 0.0
      %1184 = vmatprep.subr.mxu0 0.0
      %1185 = vmatpush1.msra.mxu0 0.0
      %1186 = vmatprep.subr.mxu0 0.0
      %1187 = vmatpush1.msra.mxu0 0.0
      %1188 = vmatprep.subr.mxu0 0.0
      %1189 = vmatpush1.msra.mxu0 0.0
      %1190 = vmatprep.subr.mxu0 0.0
      %1191 = vmatpush1.msra.mxu0 0.0
      %1192 = vmatprep.subr.mxu0 0.0
      %1193 = vmatpush1.msra.mxu0 0.0
      %1194 = vmatprep.subr.mxu0 0.0
      %1195 = vmatpush1.msra.mxu0 0.0
      %1196 = vmatprep.subr.mxu0 0.0
      %1197 = vmatpush1.msra.mxu0 0.0
      %1198 = vmatprep.subr.mxu0 0.0
      %1199 = vmatpush1.msra.mxu0 0.0
      %1200 = vmatprep.subr.mxu0 0.0
      %1201 = vmatpush1.msra.mxu0 0.0
      %1202 = vmatprep.subr.mxu0 0.0
      %1203 = vmatpush1.msra.mxu0 0.0
      %1204 = vmatprep.subr.mxu0 0.0
      %1205 = vmatpush1.msra.mxu0 0.0
      %1206 = vmatprep.subr.mxu0 0.0
      %1207 = vmatpush1.msra.mxu0 0.0
      %1208 = vmatprep.subr.mxu0 0.0
      %1209 = vmatpush1.msra.mxu0 0.0
      %1210 = vmatprep.mubr.f32.mxu0 0.0
      %1211 = vmatmul.mubr.f32.gmra.mrb[0].mxu0 %v760
      %v1212 = vpop.f32.mrb[0].mxu0
      %v1213 = vadd.f32 0.0, %v1212
      %v1214 = vpop.f32.mrb[0].mxu0
      %1215 = vmatprep.mubr.f32.mxu0 0.0
      %1216 = vmatmul.mubr.f32.gmra.mrb[0].mxu0 %v763
      %v1217 = vpop.f32.mrb[0].mxu0
      %v1218 = vadd.f32 0.0, %v1217
      %v1219 = vpop.f32.mrb[0].mxu0
      %1220 = vmatprep.mubr.f32.mxu0 0.0
      %1221 = vmatmul.mubr.f32.gmra.mrb[0].mxu0 %v766
      %v1222 = vpop.f32.mrb[0].mxu0
      %v1223 = vadd.f32 0.0, %v1222
      %v1224 = vpop.f32.mrb[0].mxu0
      %1225 = vmatprep.mubr.f32.mxu0 0.0
      %1226 = vmatmul.mubr.f32.gmra.mrb[0].mxu0 %v769
      %v1227 = vpop.f32.mrb[0].mxu0
      %v1228 = vadd.f32 0.0, %v1227
      %v1229 = vpop.f32.mrb[0].mxu0
      %1230 = vmatprep.mubr.f32.mxu0 0.0
      %1231 = vmatmul.mubr.f32.gmra.mrb[0].mxu0 %v772
      %v1232 = vpop.f32.mrb[0].mxu0
      %v1233 = vadd.f32 0.0, %v1232
      %v1234 = vpop.f32.mrb[0].mxu0
      %1235 = vmatprep.mubr.f32.mxu0 0.0
      %1236 = vmatmul.mubr.f32.gmra.mrb[0].mxu0 %v775
      %v1237 = vpop.f32.mrb[0].mxu0
      %v1238 = vadd.f32 0.0, %v1237
      %v1239 = vpop.f32.mrb[0].mxu0
      %1240 = vmatprep.mubr.f32.mxu0 0.0
      %1241 = vmatmul.mubr.f32.gmra.mrb[0].mxu0 %v778
      %v1242 = vpop.f32.mrb[0].mxu0
      %v1243 = vadd.f32 0.0, %v1242
      %v1244 = vpop.f32.mrb[0].mxu0
      %1245 = vmatprep.mubr.f32.mxu0 0.0
      %1246 = vmatmul.mubr.f32.gmra.mrb[0].mxu0 %v1141
      %v1247 = vpop.f32.mrb[0].mxu0
      %v1248 = vadd.f32 0.0, %v1247
      %v1249 = vpop.f32.mrb[0].mxu0
      %1250 = vdwg.mxu0
      %v1251 = vadd.f32 %v1130, %v1213
      %v1252 = vadd.f32 %v1131, %v1218
      %v1253 = vadd.f32 %v1132, %v1223
      %v1254 = vadd.f32 %v1133, %v1228
      %v1255 = vadd.f32 %v1134, %v1233
      %v1256 = vadd.f32 %v1135, %v1238
      %v1257 = vadd.f32 %v1136, %v1243
      %v1258 = vadd.f32 %v1137, %v1248
      %s1259 = scalar_lea.vmem %s3, 24
      %v1260 = vld [vmem:[%s1259] sm:$0xf]
      %v1262 = vsel %vm519, %v1260, 0
      %1264 = vmatprep.subr.mxu0 0.0
      %1265 = vmatpush1.msra.mxu0 %v1262
      %1266 = vmatprep.subr.mxu0 0.0
      %1267 = vmatpush1.msra.mxu0 0.0
      %1268 = vmatprep.subr.mxu0 0.0
      %1269 = vmatpush1.msra.mxu0 0.0
      %1270 = vmatprep.subr.mxu0 0.0
      %1271 = vmatpush1.msra.mxu0 0.0
      %1272 = vmatprep.subr.mxu0 0.0
      %1273 = vmatpush1.msra.mxu0 0.0
      %1274 = vmatprep.subr.mxu0 0.0
      %1275 = vmatpush1.msra.mxu0 0.0
      %1276 = vmatprep.subr.mxu0 0.0
      %1277 = vmatpush1.msra.mxu0 0.0
      %1278 = vmatprep.subr.mxu0 0.0
      %1279 = vmatpush1.msra.mxu0 0.0
      %1280 = vmatprep.subr.mxu0 0.0
      %1281 = vmatpush1.msra.mxu0 0.0
      %1282 = vmatprep.subr.mxu0 0.0
      %1283 = vmatpush1.msra.mxu0 0.0
      %1284 = vmatprep.subr.mxu0 0.0
      %1285 = vmatpush1.msra.mxu0 0.0
      %1286 = vmatprep.subr.mxu0 0.0
      %1287 = vmatpush1.msra.mxu0 0.0
      %1288 = vmatprep.subr.mxu0 0.0
      %1289 = vmatpush1.msra.mxu0 0.0
      %1290 = vmatprep.subr.mxu0 0.0
      %1291 = vmatpush1.msra.mxu0 0.0
      %1292 = vmatprep.subr.mxu0 0.0
      %1293 = vmatpush1.msra.mxu0 0.0
      %1294 = vmatprep.subr.mxu0 0.0
      %1295 = vmatpush1.msra.mxu0 0.0
      %1296 = vmatprep.subr.mxu0 0.0
      %1297 = vmatpush1.msra.mxu0 0.0
      %1298 = vmatprep.subr.mxu0 0.0
      %1299 = vmatpush1.msra.mxu0 0.0
      %1300 = vmatprep.subr.mxu0 0.0
      %1301 = vmatpush1.msra.mxu0 0.0
      %1302 = vmatprep.subr.mxu0 0.0
      %1303 = vmatpush1.msra.mxu0 0.0
      %1304 = vmatprep.subr.mxu0 0.0
      %1305 = vmatpush1.msra.mxu0 0.0
      %1306 = vmatprep.subr.mxu0 0.0
      %1307 = vmatpush1.msra.mxu0 0.0
      %1308 = vmatprep.subr.mxu0 0.0
      %1309 = vmatpush1.msra.mxu0 0.0
      %1310 = vmatprep.subr.mxu0 0.0
      %1311 = vmatpush1.msra.mxu0 0.0
      %1312 = vmatprep.subr.mxu0 0.0
      %1313 = vmatpush1.msra.mxu0 0.0
      %1314 = vmatprep.subr.mxu0 0.0
      %1315 = vmatpush1.msra.mxu0 0.0
      %1316 = vmatprep.subr.mxu0 0.0
      %1317 = vmatpush1.msra.mxu0 0.0
      %1318 = vmatprep.subr.mxu0 0.0
      %1319 = vmatpush1.msra.mxu0 0.0
      %1320 = vmatprep.subr.mxu0 0.0
      %1321 = vmatpush1.msra.mxu0 0.0
      %1322 = vmatprep.subr.mxu0 0.0
      %1323 = vmatpush1.msra.mxu0 0.0
      %1324 = vmatprep.subr.mxu0 0.0
      %1325 = vmatpush1.msra.mxu0 0.0
      %1326 = vmatprep.subr.mxu0 0.0
      %1327 = vmatpush1.msra.mxu0 0.0
      %1328 = vmatprep.mubr.f32.mxu0 0.0
      %1329 = vmatmul.mubr.f32.gmra.mrb[0].mxu0 %v632
      %v1330 = vpop.f32.mrb[0].mxu0
      %v1331 = vadd.f32 0.0, %v1330
      %v1332 = vpop.f32.mrb[0].mxu0
      %1333 = vmatprep.mubr.f32.mxu0 0.0
      %1334 = vmatmul.mubr.f32.gmra.mrb[0].mxu0 %v635
      %v1335 = vpop.f32.mrb[0].mxu0
      %v1336 = vadd.f32 0.0, %v1335
      %v1337 = vpop.f32.mrb[0].mxu0
      %1338 = vmatprep.mubr.f32.mxu0 0.0
      %1339 = vmatmul.mubr.f32.gmra.mrb[0].mxu0 %v638
      %v1340 = vpop.f32.mrb[0].mxu0
      %v1341 = vadd.f32 0.0, %v1340
      %v1342 = vpop.f32.mrb[0].mxu0
      %1343 = vmatprep.mubr.f32.mxu0 0.0
      %1344 = vmatmul.mubr.f32.gmra.mrb[0].mxu0 %v641
      %v1345 = vpop.f32.mrb[0].mxu0
      %v1346 = vadd.f32 0.0, %v1345
      %v1347 = vpop.f32.mrb[0].mxu0
      %1348 = vmatprep.mubr.f32.mxu0 0.0
      %1349 = vmatmul.mubr.f32.gmra.mrb[0].mxu0 %v644
      %v1350 = vpop.f32.mrb[0].mxu0
      %v1351 = vadd.f32 0.0, %v1350
      %v1352 = vpop.f32.mrb[0].mxu0
      %1353 = vmatprep.mubr.f32.mxu0 0.0
      %1354 = vmatmul.mubr.f32.gmra.mrb[0].mxu0 %v647
      %v1355 = vpop.f32.mrb[0].mxu0
      %v1356 = vadd.f32 0.0, %v1355
      %v1357 = vpop.f32.mrb[0].mxu0
      %1358 = vmatprep.mubr.f32.mxu0 0.0
      %1359 = vmatmul.mubr.f32.gmra.mrb[0].mxu0 %v899
      %v1360 = vpop.f32.mrb[0].mxu0
      %v1361 = vadd.f32 0.0, %v1360
      %v1362 = vpop.f32.mrb[0].mxu0
      %1363 = vmatprep.mubr.f32.mxu0 0.0
      %1364 = vmatmul.mubr.f32.gmra.mrb[0].mxu0 %v496
      %v1365 = vpop.f32.mrb[0].mxu0
      %v1366 = vadd.f32 0.0, %v1365
      %v1367 = vpop.f32.mrb[0].mxu0
      %1368 = vdwg.mxu0
      %v1369 = vadd.f32 %v1251, %v1331
      %v1370 = vadd.f32 %v1252, %v1336
      %v1371 = vadd.f32 %v1253, %v1341
      %v1372 = vadd.f32 %v1254, %v1346
      %v1373 = vadd.f32 %v1255, %v1351
      %v1374 = vadd.f32 %v1256, %v1356
      %v1375 = vadd.f32 %v1257, %v1361
      %v1376 = vadd.f32 %v1258, %v1366
      %s1377 = scalar_lea.vmem %s3, 28
      %v1378 = vld [vmem:[%s1377] sm:$0xf]
      %v1380 = vsel %vm519, %v1378, 0
      %1382 = vmatprep.subr.mxu0 0.0
      %1383 = vmatpush1.msra.mxu0 %v1380
      %1384 = vmatprep.subr.mxu0 0.0
      %1385 = vmatpush1.msra.mxu0 0.0
      %1386 = vmatprep.subr.mxu0 0.0
      %1387 = vmatpush1.msra.mxu0 0.0
      %1388 = vmatprep.subr.mxu0 0.0
      %1389 = vmatpush1.msra.mxu0 0.0
      %1390 = vmatprep.subr.mxu0 0.0
      %1391 = vmatpush1.msra.mxu0 0.0
      %1392 = vmatprep.subr.mxu0 0.0
      %1393 = vmatpush1.msra.mxu0 0.0
      %1394 = vmatprep.subr.mxu0 0.0
      %1395 = vmatpush1.msra.mxu0 0.0
      %1396 = vmatprep.subr.mxu0 0.0
      %1397 = vmatpush1.msra.mxu0 0.0
      %1398 = vmatprep.subr.mxu0 0.0
      %1399 = vmatpush1.msra.mxu0 0.0
      %1400 = vmatprep.subr.mxu0 0.0
      %1401 = vmatpush1.msra.mxu0 0.0
      %1402 = vmatprep.subr.mxu0 0.0
      %1403 = vmatpush1.msra.mxu0 0.0
      %1404 = vmatprep.subr.mxu0 0.0
      %1405 = vmatpush1.msra.mxu0 0.0
      %1406 = vmatprep.subr.mxu0 0.0
      %1407 = vmatpush1.msra.mxu0 0.0
      %1408 = vmatprep.subr.mxu0 0.0
      %1409 = vmatpush1.msra.mxu0 0.0
      %1410 = vmatprep.subr.mxu0 0.0
      %1411 = vmatpush1.msra.mxu0 0.0
      %1412 = vmatprep.subr.mxu0 0.0
      %1413 = vmatpush1.msra.mxu0 0.0
      %1414 = vmatprep.subr.mxu0 0.0
      %1415 = vmatpush1.msra.mxu0 0.0
      %1416 = vmatprep.subr.mxu0 0.0
      %1417 = vmatpush1.msra.mxu0 0.0
      %1418 = vmatprep.subr.mxu0 0.0
      %1419 = vmatpush1.msra.mxu0 0.0
      %1420 = vmatprep.subr.mxu0 0.0
      %1421 = vmatpush1.msra.mxu0 0.0
      %1422 = vmatprep.subr.mxu0 0.0
      %1423 = vmatpush1.msra.mxu0 0.0
      %1424 = vmatprep.subr.mxu0 0.0
      %1425 = vmatpush1.msra.mxu0 0.0
      %1426 = vmatprep.subr.mxu0 0.0
      %1427 = vmatpush1.msra.mxu0 0.0
      %1428 = vmatprep.subr.mxu0 0.0
      %1429 = vmatpush1.msra.mxu0 0.0
      %1430 = vmatprep.subr.mxu0 0.0
      %1431 = vmatpush1.msra.mxu0 0.0
      %1432 = vmatprep.subr.mxu0 0.0
      %1433 = vmatpush1.msra.mxu0 0.0
      %1434 = vmatprep.subr.mxu0 0.0
      %1435 = vmatpush1.msra.mxu0 0.0
      %1436 = vmatprep.subr.mxu0 0.0
      %1437 = vmatpush1.msra.mxu0 0.0
      %1438 = vmatprep.subr.mxu0 0.0
      %1439 = vmatpush1.msra.mxu0 0.0
      %1440 = vmatprep.subr.mxu0 0.0
      %1441 = vmatpush1.msra.mxu0 0.0
      %1442 = vmatprep.subr.mxu0 0.0
      %1443 = vmatpush1.msra.mxu0 0.0
      %1444 = vmatprep.subr.mxu0 0.0
      %1445 = vmatpush1.msra.mxu0 0.0
      %1446 = vmatprep.mubr.f32.mxu0 0.0
      %1447 = vmatmul.mubr.f32.gmra.mrb[0].mxu0 %v502
      %v1448 = vpop.f32.mrb[0].mxu0
      %v1449 = vadd.f32 0.0, %v1448
      %v1450 = vpop.f32.mrb[0].mxu0
      %1451 = vmatprep.mubr.f32.mxu0 0.0
      %1452 = vmatmul.mubr.f32.gmra.mrb[0].mxu0 %v505
      %v1453 = vpop.f32.mrb[0].mxu0
      %v1454 = vadd.f32 0.0, %v1453
      %v1455 = vpop.f32.mrb[0].mxu0
      %1456 = vmatprep.mubr.f32.mxu0 0.0
      %1457 = vmatmul.mubr.f32.gmra.mrb[0].mxu0 %v508
      %v1458 = vpop.f32.mrb[0].mxu0
      %v1459 = vadd.f32 0.0, %v1458
      %v1460 = vpop.f32.mrb[0].mxu0
      %1461 = vmatprep.mubr.f32.mxu0 0.0
      %1462 = vmatmul.mubr.f32.gmra.mrb[0].mxu0 %v511
      %v1463 = vpop.f32.mrb[0].mxu0
      %v1464 = vadd.f32 0.0, %v1463
      %v1465 = vpop.f32.mrb[0].mxu0
      %1466 = vmatprep.mubr.f32.mxu0 0.0
      %1467 = vmatmul.mubr.f32.gmra.mrb[0].mxu0 %v514
      %v1468 = vpop.f32.mrb[0].mxu0
      %v1469 = vadd.f32 0.0, %v1468
      %v1470 = vpop.f32.mrb[0].mxu0
      %1471 = vmatprep.mubr.f32.mxu0 0.0
      %1472 = vmatmul.mubr.f32.gmra.mrb[0].mxu0 %v517
      %v1473 = vpop.f32.mrb[0].mxu0
      %v1474 = vadd.f32 0.0, %v1473
      %v1475 = vpop.f32.mrb[0].mxu0
      %1476 = vmatprep.mubr.f32.mxu0 0.0
      %1477 = vmatmul.mubr.f32.gmra.mrb[0].mxu0 %v1020
      %v1478 = vpop.f32.mrb[0].mxu0
      %v1479 = vadd.f32 0.0, %v1478
      %v1480 = vpop.f32.mrb[0].mxu0
      %1481 = vmatprep.mubr.f32.mxu0 0.0
      %1482 = vmatmul.mubr.f32.gmra.mrb[0].mxu0 %v496
      %v1483 = vpop.f32.mrb[0].mxu0
      %v1484 = vadd.f32 0.0, %v1483
      %v1485 = vpop.f32.mrb[0].mxu0
      %1486 = vdwg.mxu0
      %v1487 = vadd.f32 %v1369, %v1449
      %v1488 = vadd.f32 %v1370, %v1454
      %v1489 = vadd.f32 %v1371, %v1459
      %v1490 = vadd.f32 %v1372, %v1464
      %v1491 = vadd.f32 %v1373, %v1469
      %v1492 = vadd.f32 %v1374, %v1474
      %v1493 = vadd.f32 %v1375, %v1479
      %v1494 = vadd.f32 %v1376, %v1484
      %s1495 = scalar_lea.vmem %s3, 32
      %v1496 = vld [vmem:[%s1495] sm:$0xf]
      %v1498 = vsel %vm519, %v1496, 0
      %1500 = vmatprep.subr.mxu0 0.0
      %1501 = vmatpush1.msra.mxu0 %v1498
      %1502 = vmatprep.subr.mxu0 0.0
      %1503 = vmatpush1.msra.mxu0 0.0
      %1504 = vmatprep.subr.mxu0 0.0
      %1505 = vmatpush1.msra.mxu0 0.0
      %1506 = vmatprep.subr.mxu0 0.0
      %1507 = vmatpush1.msra.mxu0 0.0
      %1508 = vmatprep.subr.mxu0 0.0
      %1509 = vmatpush1.msra.mxu0 0.0
      %1510 = vmatprep.subr.mxu0 0.0
      %1511 = vmatpush1.msra.mxu0 0.0
      %1512 = vmatprep.subr.mxu0 0.0
      %1513 = vmatpush1.msra.mxu0 0.0
      %1514 = vmatprep.subr.mxu0 0.0
      %1515 = vmatpush1.msra.mxu0 0.0
      %1516 = vmatprep.subr.mxu0 0.0
      %1517 = vmatpush1.msra.mxu0 0.0
      %1518 = vmatprep.subr.mxu0 0.0
      %1519 = vmatpush1.msra.mxu0 0.0
      %1520 = vmatprep.subr.mxu0 0.0
      %1521 = vmatpush1.msra.mxu0 0.0
      %1522 = vmatprep.subr.mxu0 0.0
      %1523 = vmatpush1.msra.mxu0 0.0
      %1524 = vmatprep.subr.mxu0 0.0
      %1525 = vmatpush1.msra.mxu0 0.0
      %1526 = vmatprep.subr.mxu0 0.0
      %1527 = vmatpush1.msra.mxu0 0.0
      %1528 = vmatprep.subr.mxu0 0.0
      %1529 = vmatpush1.msra.mxu0 0.0
      %1530 = vmatprep.subr.mxu0 0.0
      %1531 = vmatpush1.msra.mxu0 0.0
      %1532 = vmatprep.subr.mxu0 0.0
      %1533 = vmatpush1.msra.mxu0 0.0
      %1534 = vmatprep.subr.mxu0 0.0
      %1535 = vmatpush1.msra.mxu0 0.0
      %1536 = vmatprep.subr.mxu0 0.0
      %1537 = vmatpush1.msra.mxu0 0.0
      %1538 = vmatprep.subr.mxu0 0.0
      %1539 = vmatpush1.msra.mxu0 0.0
      %1540 = vmatprep.subr.mxu0 0.0
      %1541 = vmatpush1.msra.mxu0 0.0
      %1542 = vmatprep.subr.mxu0 0.0
      %1543 = vmatpush1.msra.mxu0 0.0
      %1544 = vmatprep.subr.mxu0 0.0
      %1545 = vmatpush1.msra.mxu0 0.0
      %1546 = vmatprep.subr.mxu0 0.0
      %1547 = vmatpush1.msra.mxu0 0.0
      %1548 = vmatprep.subr.mxu0 0.0
      %1549 = vmatpush1.msra.mxu0 0.0
      %1550 = vmatprep.subr.mxu0 0.0
      %1551 = vmatpush1.msra.mxu0 0.0
      %1552 = vmatprep.subr.mxu0 0.0
      %1553 = vmatpush1.msra.mxu0 0.0
      %1554 = vmatprep.subr.mxu0 0.0
      %1555 = vmatpush1.msra.mxu0 0.0
      %1556 = vmatprep.subr.mxu0 0.0
      %1557 = vmatpush1.msra.mxu0 0.0
      %1558 = vmatprep.subr.mxu0 0.0
      %1559 = vmatpush1.msra.mxu0 0.0
      %1560 = vmatprep.subr.mxu0 0.0
      %1561 = vmatpush1.msra.mxu0 0.0
      %1562 = vmatprep.subr.mxu0 0.0
      %1563 = vmatpush1.msra.mxu0 0.0
      %1564 = vmatprep.mubr.f32.mxu0 0.0
      %1565 = vmatmul.mubr.f32.gmra.mrb[0].mxu0 %v763
      %v1566 = vpop.f32.mrb[0].mxu0
      %v1567 = vadd.f32 0.0, %v1566
      %v1568 = vpop.f32.mrb[0].mxu0
      %1569 = vmatprep.mubr.f32.mxu0 0.0
      %1570 = vmatmul.mubr.f32.gmra.mrb[0].mxu0 %v766
      %v1571 = vpop.f32.mrb[0].mxu0
      %v1572 = vadd.f32 0.0, %v1571
      %v1573 = vpop.f32.mrb[0].mxu0
      %1574 = vmatprep.mubr.f32.mxu0 0.0
      %1575 = vmatmul.mubr.f32.gmra.mrb[0].mxu0 %v769
      %v1576 = vpop.f32.mrb[0].mxu0
      %v1577 = vadd.f32 0.0, %v1576
      %v1578 = vpop.f32.mrb[0].mxu0
      %1579 = vmatprep.mubr.f32.mxu0 0.0
      %1580 = vmatmul.mubr.f32.gmra.mrb[0].mxu0 %v772
      %v1581 = vpop.f32.mrb[0].mxu0
      %v1582 = vadd.f32 0.0, %v1581
      %v1583 = vpop.f32.mrb[0].mxu0
      %1584 = vmatprep.mubr.f32.mxu0 0.0
      %1585 = vmatmul.mubr.f32.gmra.mrb[0].mxu0 %v775
      %v1586 = vpop.f32.mrb[0].mxu0
      %v1587 = vadd.f32 0.0, %v1586
      %v1588 = vpop.f32.mrb[0].mxu0
      %1589 = vmatprep.mubr.f32.mxu0 0.0
      %1590 = vmatmul.mubr.f32.gmra.mrb[0].mxu0 %v778
      %v1591 = vpop.f32.mrb[0].mxu0
      %v1592 = vadd.f32 0.0, %v1591
      %v1593 = vpop.f32.mrb[0].mxu0
      %1594 = vmatprep.mubr.f32.mxu0 0.0
      %1595 = vmatmul.mubr.f32.gmra.mrb[0].mxu0 %v1141
      %v1596 = vpop.f32.mrb[0].mxu0
      %v1597 = vadd.f32 0.0, %v1596
      %v1598 = vpop.f32.mrb[0].mxu0
      %1599 = vmatprep.mubr.f32.mxu0 0.0
      %1600 = vmatmul.mubr.f32.gmra.mrb[0].mxu0 %v496
      %v1601 = vpop.f32.mrb[0].mxu0
      %v1602 = vadd.f32 0.0, %v1601
      %v1603 = vpop.f32.mrb[0].mxu0
      %1604 = vdwg.mxu0
      %v1605 = vadd.f32 %v1487, %v1567
      %v1606 = vadd.f32 %v1488, %v1572
      %v1607 = vadd.f32 %v1489, %v1577
      %v1608 = vadd.f32 %v1490, %v1582
      %v1609 = vadd.f32 %v1491, %v1587
      %v1610 = vadd.f32 %v1492, %v1592
      %v1611 = vadd.f32 %v1493, %v1597
      %v1612 = vadd.f32 %v1494, %v1602
      %v1613 = vld [vmem:[%s4] sm:$0x1]
      %v1615 = vlaneseq
      %v1616 = vshrl.u32 %v1615, 7
      %v1617 = vsub.s32 0, %v1616
      %v1618 = vrot.slane %v1613, %v1617
      %v1620 = vadd.f32 %v1605, %v1618
      %v1621 = vadd.f32 %v1606, %v1618
      %v1622 = vadd.f32 %v1607, %v1618
      %v1623 = vadd.f32 %v1608, %v1618
      %v1624 = vadd.f32 %v1609, %v1618
      %v1625 = vadd.f32 %v1610, %v1618
      %v1626 = vadd.f32 %v1611, %v1618
      %v1627 = vadd.f32 %v1612, %v1618
      %v1628 = vmax.f32 %v1620, 0.0
      %v1629 = vmax.f32 %v1621, 0.0
      %v1630 = vmax.f32 %v1622, 0.0
      %v1631 = vmax.f32 %v1623, 0.0
      %v1632 = vmax.f32 %v1624, 0.0
      %v1633 = vmax.f32 %v1625, 0.0
      %v1634 = vmax.f32 %v1626, 0.0
      %v1635 = vmax.f32 %v1627, 0.0
      %v1636 = vld [vmem:[%s5] sm:$0xf]
      %v1637 = vld [vmem:[%s6] sm:$0x1]
      %v1639 = vlaneseq
      %v1640 = vshrl.u32 %v1639, 7
      %v1641 = vsub.s32 0, %v1640
      %v1642 = vrot.slane %v1637, %v1641
      %v1645 = vsel %vm494, %v1628, 0
      %v1648 = vsel %vm494, %v1629, 0
      %v1651 = vsel %vm494, %v1630, 0
      %v1654 = vsel %vm494, %v1631, 0
      %v1657 = vsel %vm494, %v1632, 0
      %v1660 = vsel %vm494, %v1633, 0
      %v1663 = vsel %vm494, %v1634, 0
      %v1666 = vsel %vm494, %v1635, 0
      %v1669 = vsel %vm519, %v1636, 0
      %1671 = vmatprep.subr.mxu0 0.0
      %1672 = vmatpush1.msra.mxu0 %v1669
      %1673 = vmatprep.subr.mxu0 0.0
      %1674 = vmatpush1.msra.mxu0 0.0
      %1675 = vmatprep.subr.mxu0 0.0
      %1676 = vmatpush1.msra.mxu0 0.0
      %1677 = vmatprep.subr.mxu0 0.0
      %1678 = vmatpush1.msra.mxu0 0.0
      %1679 = vmatprep.subr.mxu0 0.0
      %1680 = vmatpush1.msra.mxu0 0.0
      %1681 = vmatprep.subr.mxu0 0.0
      %1682 = vmatpush1.msra.mxu0 0.0
      %1683 = vmatprep.subr.mxu0 0.0
      %1684 = vmatpush1.msra.mxu0 0.0
      %1685 = vmatprep.subr.mxu0 0.0
      %1686 = vmatpush1.msra.mxu0 0.0
      %1687 = vmatprep.subr.mxu0 0.0
      %1688 = vmatpush1.msra.mxu0 0.0
      %1689 = vmatprep.subr.mxu0 0.0
      %1690 = vmatpush1.msra.mxu0 0.0
      %1691 = vmatprep.subr.mxu0 0.0
      %1692 = vmatpush1.msra.mxu0 0.0
      %1693 = vmatprep.subr.mxu0 0.0
      %1694 = vmatpush1.msra.mxu0 0.0
      %1695 = vmatprep.subr.mxu0 0.0
      %1696 = vmatpush1.msra.mxu0 0.0
      %1697 = vmatprep.subr.mxu0 0.0
      %1698 = vmatpush1.msra.mxu0 0.0
      %1699 = vmatprep.subr.mxu0 0.0
      %1700 = vmatpush1.msra.mxu0 0.0
      %1701 = vmatprep.subr.mxu0 0.0
      %1702 = vmatpush1.msra.mxu0 0.0
      %1703 = vmatprep.subr.mxu0 0.0
      %1704 = vmatpush1.msra.mxu0 0.0
      %1705 = vmatprep.subr.mxu0 0.0
      %1706 = vmatpush1.msra.mxu0 0.0
      %1707 = vmatprep.subr.mxu0 0.0
      %1708 = vmatpush1.msra.mxu0 0.0
      %1709 = vmatprep.subr.mxu0 0.0
      %1710 = vmatpush1.msra.mxu0 0.0
      %1711 = vmatprep.subr.mxu0 0.0
      %1712 = vmatpush1.msra.mxu0 0.0
      %1713 = vmatprep.subr.mxu0 0.0
      %1714 = vmatpush1.msra.mxu0 0.0
      %1715 = vmatprep.subr.mxu0 0.0
      %1716 = vmatpush1.msra.mxu0 0.0
      %1717 = vmatprep.subr.mxu0 0.0
      %1718 = vmatpush1.msra.mxu0 0.0
      %1719 = vmatprep.subr.mxu0 0.0
      %1720 = vmatpush1.msra.mxu0 0.0
      %1721 = vmatprep.subr.mxu0 0.0
      %1722 = vmatpush1.msra.mxu0 0.0
      %1723 = vmatprep.subr.mxu0 0.0
      %1724 = vmatpush1.msra.mxu0 0.0
      %1725 = vmatprep.subr.mxu0 0.0
      %1726 = vmatpush1.msra.mxu0 0.0
      %1727 = vmatprep.subr.mxu0 0.0
      %1728 = vmatpush1.msra.mxu0 0.0
      %1729 = vmatprep.subr.mxu0 0.0
      %1730 = vmatpush1.msra.mxu0 0.0
      %1731 = vmatprep.subr.mxu0 0.0
      %1732 = vmatpush1.msra.mxu0 0.0
      %1733 = vmatprep.subr.mxu0 0.0
      %1734 = vmatpush1.msra.mxu0 0.0
      %1735 = vmatprep.mubr.f32.mxu0 0.0
      %1736 = vmatmul.mubr.f32.gmra.mrb[0].mxu0 %v1645
      %v1737 = vpop.f32.mrb[0].mxu0
      %v1738 = vadd.f32 %v1642, %v1737
      %v1739 = vpop.f32.mrb[0].mxu0
      %1740 = vmatprep.mubr.f32.mxu0 0.0
      %1741 = vmatmul.mubr.f32.gmra.mrb[0].mxu0 %v1648
      %v1742 = vpop.f32.mrb[0].mxu0
      %v1743 = vadd.f32 %v1642, %v1742
      %v1744 = vpop.f32.mrb[0].mxu0
      %1745 = vmatprep.mubr.f32.mxu0 0.0
      %1746 = vmatmul.mubr.f32.gmra.mrb[0].mxu0 %v1651
      %v1747 = vpop.f32.mrb[0].mxu0
      %v1748 = vadd.f32 %v1642, %v1747
      %v1749 = vpop.f32.mrb[0].mxu0
      %1750 = vmatprep.mubr.f32.mxu0 0.0
      %1751 = vmatmul.mubr.f32.gmra.mrb[0].mxu0 %v1654
      %v1752 = vpop.f32.mrb[0].mxu0
      %v1753 = vadd.f32 %v1642, %v1752
      %v1754 = vpop.f32.mrb[0].mxu0
      %1755 = vmatprep.mubr.f32.mxu0 0.0
      %1756 = vmatmul.mubr.f32.gmra.mrb[0].mxu0 %v1657
      %v1757 = vpop.f32.mrb[0].mxu0
      %v1758 = vadd.f32 %v1642, %v1757
      %v1759 = vpop.f32.mrb[0].mxu0
      %1760 = vmatprep.mubr.f32.mxu0 0.0
      %1761 = vmatmul.mubr.f32.gmra.mrb[0].mxu0 %v1660
      %v1762 = vpop.f32.mrb[0].mxu0
      %v1763 = vadd.f32 %v1642, %v1762
      %v1764 = vpop.f32.mrb[0].mxu0
      %1765 = vmatprep.mubr.f32.mxu0 0.0
      %1766 = vmatmul.mubr.f32.gmra.mrb[0].mxu0 %v1663
      %v1767 = vpop.f32.mrb[0].mxu0
      %v1768 = vadd.f32 %v1642, %v1767
      %v1769 = vpop.f32.mrb[0].mxu0
      %1770 = vmatprep.mubr.f32.mxu0 0.0
      %1771 = vmatmul.mubr.f32.gmra.mrb[0].mxu0 %v1666
      %v1772 = vpop.f32.mrb[0].mxu0
      %v1773 = vadd.f32 %v1642, %v1772
      %v1774 = vpop.f32.mrb[0].mxu0
      %1775 = vdwg.mxu0
      %v1776 = vadd.f32 %v1738, %v279
      %v1777 = vadd.f32 %v1743, %v280
      %v1778 = vadd.f32 %v1748, %v281
      %v1779 = vadd.f32 %v1753, %v282
      %v1780 = vadd.f32 %v1758, %v283
      %v1781 = vadd.f32 %v1763, %v284
      %v1782 = vadd.f32 %v1768, %v285
      %v1783 = vadd.f32 %v1773, %v286
      %v1784 = vmax.f32 %v1776, 0.0
      %v1785 = vmax.f32 %v1777, 0.0
      %v1786 = vmax.f32 %v1778, 0.0
      %v1787 = vmax.f32 %v1779, 0.0
      %v1788 = vmax.f32 %v1780, 0.0
      %v1789 = vmax.f32 %v1781, 0.0
      %v1790 = vmax.f32 %v1782, 0.0
      %v1791 = vmax.f32 %v1783, 0.0
      %1792 = vst.msk [vmem:[%s278] sm:$0xff] %vm296, %v1784
      %1793 = vst.msk [vmem:[%s278 + $0x8] sm:$0xff] %vm296, %v1785
      %1794 = vst.msk [vmem:[%s278 + $0x10] sm:$0xff] %vm296, %v1786
      %1795 = vst.msk [vmem:[%s278 + $0x18] sm:$0xff] %vm296, %v1787
      %1796 = vst.msk [vmem:[%s278 + $0x20] sm:$0xff] %vm296, %v1788
      %1797 = vst.msk [vmem:[%s278 + $0x28] sm:$0xff] %vm296, %v1789
      %1798 = vst.msk [vmem:[%s278 + $0x30] sm:$0xff] %vm296, %v1790
      %1799 = vst.msk [vmem:[%s278 + $0x38] sm:$0xff] %vm296, %v1791
      %p1800 = scmp.lt.s32.totalorder %s18, 1
      %s1801 = scalar_select %p1800, %s18, 1
      %s1802 = smul.addr %s1801, 8
      %s1803 = smul.addr %s1802, 8
      %s1804 = scalar_lea.vmem %s7, %s1803
      // Predicated region
      $region49: #{tpu_custom_call.1} parent=47 // pred_check
        %p1805 = pneg %p188
      $region50: #{tpu_custom_call.1} parent=47 // pred_check_branch
        %1807 = sbr.rel (%p1805) target = $region52
      $region51: #{tpu_custom_call.1} parent=47 // pred_region
        _
      $region52: #{tpu_custom_call.1} parent=47 // pred_fallthru
        _
    $region48: #{tpu_custom_call.1} parent=5 // pred_fallthru
      _
    %p1808 = scmp.le.s32.totalorder 2, %s13
    // Predicated region
    $region53: #{tpu_custom_call.1} parent=5 // pred_check
      %p1809 = pneg %p1808
    $region54: #{tpu_custom_call.1} parent=5 // pred_check_branch
      %1811 = sbr.rel (%p1809) target = $region56
    $region55: #{tpu_custom_call.1} parent=5 // pred_region
      %s1812 = ssub.s32 %s13, 2
      // Predicated region
      $region57: #{tpu_custom_call.1} parent=55 // pred_check
        %p1813 = pneg %p194
      $region58: #{tpu_custom_call.1} parent=55 // pred_check_branch
        %1815 = sbr.rel (%p1813) target = $region60
      $region59: #{tpu_custom_call.1} parent=55 // pred_region
        %p1816 = scmp.lt.s32.totalorder %s19, 1
        %s1817 = scalar_select %p1816, %s19, 1
        %s1818 = smul.addr %s1817, 8
        %s1819 = smul.addr %s1818, 8
        %s1820 = scalar_lea.vmem %s7, %s1819
      $region60: #{tpu_custom_call.1} parent=55 // pred_fallthru
        _
    $region56: #{tpu_custom_call.1} parent=5 // pred_fallthru
      _
  $region6: #{tpu_custom_call.1} parent=0 // loop_footer
    %s17 = sadd.s32 1, %s13
  $region7: #{tpu_custom_call.1} parent=0 // loop_footer_branch
    %12 = sbr.rel target = $region3
  $region8: #{tpu_custom_call.1} parent=0 // loop_exit
    _

</llo_original>
